<compile_context>
chip_gen: v7x
topology: tpu7x:2x2x1
jax: 0.10.0
libtpu: 0.0.40
codegen_flags: <defaults>
</compile_context>

<pallas_src>
import jax
import jax.numpy as jnp
from jax.experimental import pallas as pl
from jax.experimental.pallas import tpu as pltpu

EPS = 1e-5  # PyTorch nn.LayerNorm default


def _round_up(x, m):
    return (x + m - 1) // m * m


def _vmem_capacity_bytes():
    try:
        return int(pltpu.get_tpu_info().vmem_capacity_bytes)
    except Exception:
        return 64 << 20  # conservative (v7x per-TC VMEM)


# --------------------------------------------------------------------------
# Kernels
# --------------------------------------------------------------------------
def _prenorm_linear_resident_kernel(x_ref, gamma_ref, beta_ref, w_ref, b_ref,
                                    o_ref):
    """Weight-resident path: 1-D grid over row tiles, full (D, D) weight in VMEM.

    x_ref:     (rt, D)  activations (storage dtype)
    gamma_ref: (1, D)   f32 LayerNorm weight
    beta_ref:  (1, D)   f32 LayerNorm bias
    w_ref:     (D, D)   Linear weight, (in, out) layout, storage dtype
    b_ref:     (1, D)   f32 Linear bias
    o_ref:     (rt, D)
    """
    x = x_ref[...].astype(jnp.float32)

    # One-pass LN statistics in f32 (E[x], E[x^2]).
    mean = jnp.mean(x, axis=-1, keepdims=True)
    mean_sq = jnp.mean(x * x, axis=-1, keepdims=True)
    var = mean_sq - mean * mean
    xn = (x - mean) * jax.lax.rsqrt(var + EPS)
    y = xn * gamma_ref[...] + beta_ref[...]

    # fn: Linear(dim, dim). Matmul in the weight's storage dtype, f32 acc.
    out = jnp.dot(y.astype(w_ref.dtype), w_ref[...],
                  preferred_element_type=jnp.float32)
    o_ref[...] = (out + b_ref[...]).astype(o_ref.dtype)


def _prenorm_linear_tiled_kernel(x_ref, gamma_ref, beta_ref, w_ref, b_ref,
                                 o_ref, y_ref):
    """Tiled-weight path: grid (row tiles, D // tn); LayerNorm computed once per
    row tile (j == 0) and cached in VMEM scratch `y_ref` for all feature slabs.
    """
    @pl.when(pl.program_id(1) == 0)
    def _():
        x = x_ref[...].astype(jnp.float32)
        mean = jnp.mean(x, axis=-1, keepdims=True)
        mean_sq = jnp.mean(x * x, axis=-1, keepdims=True)
        var = mean_sq - mean * mean
        xn = (x - mean) * jax.lax.rsqrt(var + EPS)
        y_ref[...] = (xn * gamma_ref[...] + beta_ref[...]).astype(y_ref.dtype)

    out = jnp.dot(y_ref[...], w_ref[...], preferred_element_type=jnp.float32)
    o_ref[...] = (out + b_ref[...]).astype(o_ref.dtype)


# --------------------------------------------------------------------------
# Wrapper
# --------------------------------------------------------------------------
def prenorm_linear(x, gamma, beta, w, b, *, row_tile=None, tn=None):
    """PreNorm(dim, Linear(dim, dim)): LayerNorm over last dim, then y @ w + b.

    x: [B, N, D]; gamma/beta/b: [D]; w: [D, D] stored (in, out) = W.T.
    """
    B, N, D = x.shape
    rows = B * N
    x2 = x.reshape(rows, D)

    it_x = jnp.dtype(x.dtype).itemsize
    it_w = jnp.dtype(w.dtype).itemsize
    it_o = it_x

    cap = _vmem_capacity_bytes()
    budget = max(cap - (16 << 20), cap * 3 // 4)  # leave pipeline headroom

    # Pre-cast the small params once in the wrapper.
    gamma2 = gamma.reshape(1, D).astype(jnp.float32)
    beta2 = beta.reshape(1, D).astype(jnp.float32)
    b2 = b.reshape(1, D).astype(jnp.float32)

    rup = _round_up(rows, 8)

    def working_set(rt_, tn_):
        ws = (2 * rt_ * D * it_x           # x row tiles (double-buffered)
              + 2 * D * tn_ * it_w         # weight slab(s)
              + 2 * rt_ * tn_ * it_o       # output tiles
              + 5 * rt_ * D * 4            # in-kernel f32 LN temporaries
              + 6 * D * 4)                 # gamma/beta/bias
        if tn_ != D:
            ws += rt_ * D * it_w           # normalized-y scratch (tiled path)
        return ws

    if row_tile is not None:
        row_cands = [min(_round_up(int(row_tile), 8), rup)]
    else:
        row_cands = sorted({min(c, rup)
                            for c in (1024, 512, 256, 128, 64, 32, 16, 8)},
                           reverse=True)

    chosen_rt = None
    chosen_tn = None

    # --- Strategy A: full weight resident in VMEM (tn = D, 1-D grid). ---
    if tn is None or tn == D:
        for rt_ in row_cands:
            if working_set(rt_, D) <= budget:
                chosen_rt, chosen_tn = rt_, D
                break

    # --- Strategy B: tile the weight over output features, cache LN output. ---
    if chosen_rt is None:
        if tn is not None and tn != D:
            tn_cands = [int(tn)]
        else:
            tn_cands = [t for t in (1024, 512, 256, 128) if D % t == 0]
        if not tn_cands:
            # No 128-multiple divides D: keep the full feature dim (last resort).
            chosen_rt, chosen_tn = row_cands[-1], D
        else:
            for t in tn_cands:
                for rt_ in row_cands:
                    if working_set(rt_, t) <= budget:
                        chosen_rt, chosen_tn = rt_, t
                        break
                if chosen_rt is not None:
                    break
            if chosen_rt is None:
                chosen_rt, chosen_tn = row_cands[-1], tn_cands[-1]

    rt, tn = chosen_rt, chosen_tn
    assert D % tn == 0, "tn must divide D"

    # VMEM limit: working set + headroom, never above the physical capacity.
    vmem_limit = int(min(cap, max(working_set(rt, tn) + (8 << 20), 16 << 20)))

    cost = pl.CostEstimate(
        flops=2 * rows * D * D + 9 * rows * D,
        transcendentals=rows,
        bytes_accessed=(rows * D * it_x + D * D * it_w
                        + rows * D * it_o + 3 * D * 4),
    )

    if tn == D:
        out2 = pl.pallas_call(
            _prenorm_linear_resident_kernel,
            out_shape=jax.ShapeDtypeStruct((rows, D), x.dtype),
            grid_spec=pltpu.PrefetchScalarGridSpec(
                num_scalar_prefetch=0,
                grid=(pl.cdiv(rows, rt),),
                in_specs=[
                    pl.BlockSpec((rt, D), lambda i: (i, 0)),   # x row tile
                    pl.BlockSpec((1, D), lambda i: (0, 0)),    # gamma
                    pl.BlockSpec((1, D), lambda i: (0, 0)),    # beta
                    pl.BlockSpec((D, D), lambda i: (0, 0)),    # resident weight
                    pl.BlockSpec((1, D), lambda i: (0, 0)),    # bias
                ],
                out_specs=pl.BlockSpec((rt, D), lambda i: (i, 0)),
            ),
            compiler_params=pltpu.CompilerParams(
                dimension_semantics=("parallel",),
                vmem_limit_bytes=vmem_limit),
            cost_estimate=cost,
        )(x2, gamma2, beta2, w, b2)
    else:
        out2 = pl.pallas_call(
            _prenorm_linear_tiled_kernel,
            out_shape=jax.ShapeDtypeStruct((rows, D), x.dtype),
            grid_spec=pltpu.PrefetchScalarGridSpec(
                num_scalar_prefetch=0,
                grid=(pl.cdiv(rows, rt), D // tn),
                in_specs=[
                    pl.BlockSpec((rt, D), lambda i, j: (i, 0)),   # x row tile
                    pl.BlockSpec((1, D), lambda i, j: (0, 0)),    # gamma
                    pl.BlockSpec((1, D), lambda i, j: (0, 0)),    # beta
                    pl.BlockSpec((D, tn), lambda i, j: (0, j)),   # weight slab
                    pl.BlockSpec((1, tn), lambda i, j: (0, j)),   # bias slab
                ],
                out_specs=pl.BlockSpec((rt, tn), lambda i, j: (i, j)),
                scratch_shapes=[pltpu.VMEM((rt, D), w.dtype)],    # cached y
            ),
            compiler_params=pltpu.CompilerParams(
                dimension_semantics=("parallel", "arbitrary"),
                vmem_limit_bytes=vmem_limit),
            cost_estimate=cost,
        )(x2, gamma2, beta2, w, b2)

    return out2.reshape(B, N, D)


# --------------------------------------------------------------------------
# Reference + tests
# --------------------------------------------------------------------------
def reference(x, gamma, beta, w, b):
    xf = x.astype(jnp.float32)
    mean = jnp.mean(xf, axis=-1, keepdims=True)
    var = jnp.mean((xf - mean) ** 2, axis=-1, keepdims=True)
    xn = (xf - mean) * jax.lax.rsqrt(var + EPS)
    y = xn * gamma.astype(jnp.float32) + beta.astype(jnp.float32)
    out = y @ w.astype(jnp.float32) + b.astype(jnp.float32)
    return out.astype(x.dtype)


def _run_case(key, B, N, D, *, w_dtype=jnp.float32, atol=1e-2, rtol=1e-2, **kw):
    kx, kg, kbt, kw_, kb = jax.random.split(key, 5)
    x = jax.random.normal(kx, (B, N, D), dtype=jnp.float32)
    gamma = 1.0 + 0.1 * jax.random.normal(kg, (D,), dtype=jnp.float32)
    beta = 0.1 * jax.random.normal(kbt, (D,), dtype=jnp.float32)
    # Linear(dim, dim): weight stored as (in, out) = W.T
    w = (jax.random.normal(kw_, (D, D), dtype=jnp.float32)
         * (1.0 / jnp.sqrt(D))).astype(w_dtype)
    b = 0.01 * jax.random.normal(kb, (D,), dtype=jnp.float32)

    out = jax.block_until_ready(prenorm_linear(x, gamma, beta, w, b, **kw))
    ref = reference(x, gamma, beta, w, b)
    assert out.shape == (B, N, D)
    assert jnp.allclose(out, ref, atol=atol, rtol=rtol), (
        f"mismatch vs reference (B={B}, N={N}, D={D}, w_dtype={w_dtype}): "
        f"max abs diff {float(jnp.max(jnp.abs(out - ref)))}")


if __name__ == "__main__":
    key = jax.random.PRNGKey(0)
    k1, k2, k3, k4 = jax.random.split(key, 4)

    # Weight-resident path with a ragged last row tile (400 rows, tile 256).
    _run_case(k1, B=2, N=200, D=256, row_tile=256)

    # Tiled-weight path: normalized y cached in scratch, j axis "arbitrary".
    _run_case(k2, B=2, N=136, D=256, row_tile=128, tn=128)

    # bf16 weights: half the weight HBM traffic, bf16 MXU rate, f32 accumulation.
    _run_case(k3, B=2, N=200, D=256, w_dtype=jnp.bfloat16, atol=5e-2, rtol=5e-2)

    # Small-dim fallback matching the module's minimal usage shape.
    _run_case(k4, B=2, N=8, D=32)

    print("KERNEL_OK")
</pallas_src>

<mosaic_0001>
module attributes {stable_mosaic.version = 11 : i64} {
  func.func @_prenorm_linear_resident_kernel(%arg0: i32, %arg1: memref<256x256xf32, #tpu.memory_space<vmem>>, %arg2: memref<1x256xf32, #tpu.memory_space<vmem>>, %arg3: memref<1x256xf32, #tpu.memory_space<vmem>>, %arg4: memref<256x256xf32, #tpu.memory_space<vmem>>, %arg5: memref<1x256xf32, #tpu.memory_space<vmem>>, %arg6: memref<256x256xf32, #tpu.memory_space<vmem>>) attributes {dimension_semantics = [#tpu.dimension_semantics<parallel>], iteration_bounds = array<i64: 2>, scalar_prefetch = 0 : i64, scratch_operands = 0 : i64, tpu.core_type = #tpu.core_type<tc>, window_params = [{transform_indices = @transform_0, window_bounds = array<i64: 256, 256>}, {pipeline_mode = #tpu.pipeline_mode<synchronous>, transform_indices = @transform_1, window_bounds = array<i64: 1, 256>}, {pipeline_mode = #tpu.pipeline_mode<synchronous>, transform_indices = @transform_2, window_bounds = array<i64: 1, 256>}, {pipeline_mode = #tpu.pipeline_mode<synchronous>, transform_indices = @transform_3, window_bounds = array<i64: 256, 256>}, {pipeline_mode = #tpu.pipeline_mode<synchronous>, transform_indices = @transform_4, window_bounds = array<i64: 1, 256>}, {transform_indices = @transform_5, window_bounds = array<i64: 256, 256>}]} {
    %c0 = arith.constant 0 : index
    %c0_0 = arith.constant 0 : index
    %0 = vector.load %arg1[%c0, %c0_0] : memref<256x256xf32, #tpu.memory_space<vmem>>, vector<256x256xf32>
    %cst = arith.constant dense<0.000000e+00> : vector<256xf32>
    %1 = vector.multi_reduction <add>, %0, %cst [1] : vector<256x256xf32> to vector<256xf32>
    %2 = vector.shape_cast %1 : vector<256xf32> to vector<256x1xf32>
    %cst_1 = arith.constant 2.560000e+02 : f32
    %3 = vector.broadcast %cst_1 : f32 to vector<256x1xf32>
    %4 = arith.divf %2, %3 : vector<256x1xf32>
    %5 = arith.mulf %0, %0 : vector<256x256xf32>
    %cst_2 = arith.constant dense<0.000000e+00> : vector<256xf32>
    %6 = vector.multi_reduction <add>, %5, %cst_2 [1] : vector<256x256xf32> to vector<256xf32>
    %7 = vector.shape_cast %6 : vector<256xf32> to vector<256x1xf32>
    %cst_3 = arith.constant 2.560000e+02 : f32
    %8 = vector.broadcast %cst_3 : f32 to vector<256x1xf32>
    %9 = arith.divf %7, %8 : vector<256x1xf32>
    %10 = arith.mulf %4, %4 : vector<256x1xf32>
    %11 = arith.subf %9, %10 : vector<256x1xf32>
    %12 = vector.broadcast %4 : vector<256x1xf32> to vector<256x256xf32>
    %13 = arith.subf %0, %12 : vector<256x256xf32>
    %cst_4 = arith.constant 9.99999974E-6 : f32
    %14 = vector.broadcast %cst_4 : f32 to vector<256x1xf32>
    %15 = arith.addf %11, %14 : vector<256x1xf32>
    %16 = math.rsqrt %15 : vector<256x1xf32>
    %17 = vector.broadcast %16 : vector<256x1xf32> to vector<256x256xf32>
    %18 = arith.mulf %13, %17 : vector<256x256xf32>
    %c0_5 = arith.constant 0 : index
    %c0_6 = arith.constant 0 : index
    %19 = vector.load %arg2[%c0_5, %c0_6] : memref<1x256xf32, #tpu.memory_space<vmem>>, vector<1x256xf32>
    %20 = vector.broadcast %19 : vector<1x256xf32> to vector<256x256xf32>
    %21 = arith.mulf %18, %20 : vector<256x256xf32>
    %c0_7 = arith.constant 0 : index
    %c0_8 = arith.constant 0 : index
    %22 = vector.load %arg3[%c0_7, %c0_8] : memref<1x256xf32, #tpu.memory_space<vmem>>, vector<1x256xf32>
    %23 = vector.broadcast %22 : vector<1x256xf32> to vector<256x256xf32>
    %24 = arith.addf %21, %23 : vector<256x256xf32>
    %c0_9 = arith.constant 0 : index
    %c0_10 = arith.constant 0 : index
    %25 = vector.load %arg4[%c0_9, %c0_10] : memref<256x256xf32, #tpu.memory_space<vmem>>, vector<256x256xf32>
    %cst_11 = arith.constant dense<0.000000e+00> : vector<256x256xf32>
    %26 = tpu.matmul %24, %25, %cst_11 {dimension_numbers = #tpu.dot_dimension_numbers<[1], [0], [0], [1], [0, 0, 1, 1], [], []>} : vector<256x256xf32>, vector<256x256xf32>, vector<256x256xf32> -> vector<256x256xf32>
    %c0_12 = arith.constant 0 : index
    %c0_13 = arith.constant 0 : index
    %27 = vector.load %arg5[%c0_12, %c0_13] : memref<1x256xf32, #tpu.memory_space<vmem>>, vector<1x256xf32>
    %28 = vector.broadcast %27 : vector<1x256xf32> to vector<256x256xf32>
    %29 = arith.addf %26, %28 : vector<256x256xf32>
    %c0_14 = arith.constant 0 : index
    %c0_15 = arith.constant 0 : index
    %30 = vector.load %arg6[%c0_14, %c0_15] : memref<256x256xf32, #tpu.memory_space<vmem>>, vector<256x256xf32>
    tpu.vector_store %arg6[%c0_14, %c0_15], %29 {strides = array<i32>} : memref<256x256xf32, #tpu.memory_space<vmem>>, vector<256x256xf32>,
    return
  }
  func.func @transform_0(%arg0: i32) -> (i32, i32) {
    %c0_i32 = arith.constant 0 : i32
    %c0_i32_0 = arith.constant 0 : i32
    return %arg0, %c0_i32 : i32, i32
  }
  func.func @transform_1(%arg0: i32) -> (i32, i32) {
    %c0_i32 = arith.constant 0 : i32
    %c0_i32_0 = arith.constant 0 : i32
    %c0_i32_1 = arith.constant 0 : i32
    return %c0_i32, %c0_i32_0 : i32, i32
  }
  func.func @transform_2(%arg0: i32) -> (i32, i32) {
    %c0_i32 = arith.constant 0 : i32
    %c0_i32_0 = arith.constant 0 : i32
    %c0_i32_1 = arith.constant 0 : i32
    return %c0_i32, %c0_i32_0 : i32, i32
  }
  func.func @transform_3(%arg0: i32) -> (i32, i32) {
    %c0_i32 = arith.constant 0 : i32
    %c0_i32_0 = arith.constant 0 : i32
    %c0_i32_1 = arith.constant 0 : i32
    return %c0_i32, %c0_i32_0 : i32, i32
  }
  func.func @transform_4(%arg0: i32) -> (i32, i32) {
    %c0_i32 = arith.constant 0 : i32
    %c0_i32_0 = arith.constant 0 : i32
    %c0_i32_1 = arith.constant 0 : i32
    return %c0_i32, %c0_i32_0 : i32, i32
  }
  func.func @transform_5(%arg0: i32) -> (i32, i32) {
    %c0_i32 = arith.constant 0 : i32
    %c0_i32_0 = arith.constant 0 : i32
    return %arg0, %c0_i32 : i32, i32
  }
}

</mosaic_0001>

<llo_original>
// kernel: tpu_custom_call.1
$region0: #{tpu_custom_call.1}
  #allocation0 [shape = 'u32[]', space=smem, size = 0x4, offset = 0x4, fixed_abs, tag = 'smem constant byte address 0x4 - core index']
  #allocation1 [shape = 'u32[144,128]{1,0:T(1,128)}', space=vmem, size = 0x12000, scoped, tag = 'internal scratch']
  %s0 = inlined_call_operand.hbm [shape: f32[400,256], index: 0, kind: input, shape index: {}]
  %s1 = inlined_call_operand.vmem [shape: f32[1,256], index: 1, kind: input, shape index: {}]
  %s2 = inlined_call_operand.vmem [shape: f32[1,256], index: 2, kind: input, shape index: {}]
  %s3 = inlined_call_operand.hbm [shape: f32[256,256], index: 3, kind: input, shape index: {}]
  %s4 = inlined_call_operand.vmem [shape: f32[1,256], index: 4, kind: input, shape index: {}]
  %s5 = inlined_call_operand.hbm [shape: f32[400,256], index: 5, kind: output, shape index: {}]
  %s6 = sld [smem:[#allocation0]]
  $region61: #{tpu_custom_call.1} parent=0
    _
  %s8 = ssub.s32 1, %s6
  %s9 = scalar_select 0, %s8, %s6
  $region1: #{tpu_custom_call.1} parent=0
    #allocation2 [shape = 'u8[524288]{0}', space=vmem, size = 0x80000, scoped, tag = 'input window, operand 0']
    #allocation3 [shape = 's32[2]{0}', space=sflag, size = 0x8, scoped, tag = 'scoped memory for tpu_custom_call.1']
    #allocation4 [shape = 's32[2]{0}', space=sflag, size = 0x8, scoped, tag = 'scoped memory for tpu_custom_call.1']
    #allocation5 [shape = 'u8[262144]{0}', space=vmem, size = 0x40000, scoped, tag = 'input window, operand 3, single buffered']
    #allocation6 [shape = 's32[1]{0}', space=sflag, size = 0x4, scoped, tag = 'scoped memory for tpu_custom_call.1']
    #allocation7 [shape = 'u8[524288]{0}', space=vmem, size = 0x80000, scoped, tag = 'output window, operand 0']
    %10 = vsyncpa [#allocation3], 0
    %s11 = scalar_lea.sflag [#allocation3], 1
    %12 = vsyncpa %s11, 0
    %13 = vsyncpa [#allocation6], 0
    %14 = vsyncpa [#allocation4], 0
    %s15 = scalar_lea.sflag [#allocation4], 1
    %16 = vsyncpa %s15, 0
    loop: start=0, step=1, limit=4
    $region2: #{tpu_custom_call.1} parent=1 // loop_pre_header
      _
    $region3: #{tpu_custom_call.1} parent=1 // loop_header
      %s18 = sphi 0, %s22
      %p19 = scmp.ge.s32.totalorder %s18, 4
      %s28 = sphi 0, %s30
      %s31 = sphi 0, %s28
      %s32 = sphi 0, %s31
      %s48 = sphi 0, %s32
      %s52 = sphi 0, %s52
      %s54 = sphi 0, %s52
      %s55 = sphi 0, %s54
      %s69 = sphi 0, %s55
      %s73 = sphi 0, %s73
      %s75 = sphi 0, %s73
      %s76 = sphi 0, %s75
      %s90 = sphi 0, %s76
      %s94 = sphi 0, %s94
      %s96 = sphi 0, %s94
      %s97 = sphi 0, %s96
      %s111 = sphi 0, %s97
      %s115 = sphi 0, %s115
      %s117 = sphi 0, %s115
      %s118 = sphi 0, %s117
      %s132 = sphi 0, %s118
      %s138 = sphi 0, %s140
      %s141 = sphi 0, %s138
      %s142 = sphi 0, %s141
      %s158 = sphi 0, %s142
    $region4: #{tpu_custom_call.1} parent=1 // loop_header_branch
      %21 = sbr.rel (%p19) target = $region8
    $region5: #{tpu_custom_call.1} parent=1 // loop_body
      %s23 = ssub.s32 %s18, 1
      %s24 = ssub.s32 %s18, 2
      %s25 = sadd.s32 %s18, 1
      %s26 = ssub.s32 %s18, %s25
      %p27 = scmp.eq.s32.totalorder %s26, 0
      %s29 = sadd.s32 %s28, 1
      %s30 = scalar_select %p27, %s28, %s29
      %p33 = pneg %p27
      %p34 = scmp.eq.s32.totalorder %s18, 1
      %p35 = por %p33, %p34
      %p36 = scmp.ne.s32.totalorder %s28, %s31
      %p37 = scmp.eq.s32.totalorder %s18, 0
      %p38 = por %p36, %p37
      %p39 = scmp.ne.s32.totalorder %s28, %s31
      %p40 = scmp.eq.s32.totalorder %s23, 1
      %p41 = por %p39, %p40
      %p42 = scmp.ne.s32.totalorder %s31, %s32
      %p43 = scmp.eq.s32.totalorder %s23, 0
      %p44 = por %p42, %p43
      %p45 = scmp.ne.s32.totalorder %s31, %s32
      %p46 = scmp.eq.s32.totalorder %s24, 1
      %p47 = por %p45, %p46
      %p49 = scmp.ne.s32.totalorder %s32, %s48
      %p50 = scmp.eq.s32.totalorder %s24, 0
      %p51 = por %p49, %p50
      %s53 = sadd.s32 %s52, 1
      %p56 = scmp.eq.s32.totalorder %s18, 1
      %p57 = scmp.ne.s32.totalorder %s52, %s54
      %p58 = scmp.eq.s32.totalorder %s18, 0
      %p59 = por %p57, %p58
      %p60 = scmp.ne.s32.totalorder %s52, %s54
      %p61 = scmp.eq.s32.totalorder %s23, 1
      %p62 = por %p60, %p61
      %p63 = scmp.ne.s32.totalorder %s54, %s55
      %p64 = scmp.eq.s32.totalorder %s23, 0
      %p65 = por %p63, %p64
      %p66 = scmp.ne.s32.totalorder %s54, %s55
      %p67 = scmp.eq.s32.totalorder %s24, 1
      %p68 = por %p66, %p67
      %p70 = scmp.ne.s32.totalorder %s55, %s69
      %p71 = scmp.eq.s32.totalorder %s24, 0
      %p72 = por %p70, %p71
      %s74 = sadd.s32 %s73, 1
      %p77 = scmp.eq.s32.totalorder %s18, 1
      %p78 = scmp.ne.s32.totalorder %s73, %s75
      %p79 = scmp.eq.s32.totalorder %s18, 0
      %p80 = por %p78, %p79
      %p81 = scmp.ne.s32.totalorder %s73, %s75
      %p82 = scmp.eq.s32.totalorder %s23, 1
      %p83 = por %p81, %p82
      %p84 = scmp.ne.s32.totalorder %s75, %s76
      %p85 = scmp.eq.s32.totalorder %s23, 0
      %p86 = por %p84, %p85
      %p87 = scmp.ne.s32.totalorder %s75, %s76
      %p88 = scmp.eq.s32.totalorder %s24, 1
      %p89 = por %p87, %p88
      %p91 = scmp.ne.s32.totalorder %s76, %s90
      %p92 = scmp.eq.s32.totalorder %s24, 0
      %p93 = por %p91, %p92
      %s95 = sadd.s32 %s94, 1
      %p98 = scmp.eq.s32.totalorder %s18, 1
      %p99 = scmp.ne.s32.totalorder %s94, %s96
      %p100 = scmp.eq.s32.totalorder %s18, 0
      %p101 = por %p99, %p100
      %p102 = scmp.ne.s32.totalorder %s94, %s96
      %p103 = scmp.eq.s32.totalorder %s23, 1
      %p104 = por %p102, %p103
      %p105 = scmp.ne.s32.totalorder %s96, %s97
      %p106 = scmp.eq.s32.totalorder %s23, 0
      %p107 = por %p105, %p106
      %p108 = scmp.ne.s32.totalorder %s96, %s97
      %p109 = scmp.eq.s32.totalorder %s24, 1
      %p110 = por %p108, %p109
      %p112 = scmp.ne.s32.totalorder %s97, %s111
      %p113 = scmp.eq.s32.totalorder %s24, 0
      %p114 = por %p112, %p113
      %s116 = sadd.s32 %s115, 1
      %p119 = scmp.eq.s32.totalorder %s18, 1
      %p120 = scmp.ne.s32.totalorder %s115, %s117
      %p121 = scmp.eq.s32.totalorder %s18, 0
      %p122 = por %p120, %p121
      %p123 = scmp.ne.s32.totalorder %s115, %s117
      %p124 = scmp.eq.s32.totalorder %s23, 1
      %p125 = por %p123, %p124
      %p126 = scmp.ne.s32.totalorder %s117, %s118
      %p127 = scmp.eq.s32.totalorder %s23, 0
      %p128 = por %p126, %p127
      %p129 = scmp.ne.s32.totalorder %s117, %s118
      %p130 = scmp.eq.s32.totalorder %s24, 1
      %p131 = por %p129, %p130
      %p133 = scmp.ne.s32.totalorder %s118, %s132
      %p134 = scmp.eq.s32.totalorder %s24, 0
      %p135 = por %p133, %p134
      %s136 = ssub.s32 %s18, %s25
      %p137 = scmp.eq.s32.totalorder %s136, 0
      %s139 = sadd.s32 %s138, 1
      %s140 = scalar_select %p137, %s138, %s139
      %p143 = pneg %p137
      %p144 = scmp.eq.s32.totalorder %s18, 1
      %p145 = por %p143, %p144
      %p146 = scmp.ne.s32.totalorder %s138, %s141
      %p147 = scmp.eq.s32.totalorder %s18, 0
      %p148 = por %p146, %p147
      %p149 = scmp.ne.s32.totalorder %s138, %s141
      %p150 = scmp.eq.s32.totalorder %s23, 1
      %p151 = por %p149, %p150
      %p152 = scmp.ne.s32.totalorder %s141, %s142
      %p153 = scmp.eq.s32.totalorder %s23, 0
      %p154 = por %p152, %p153
      %p155 = scmp.ne.s32.totalorder %s141, %s142
      %p156 = scmp.eq.s32.totalorder %s24, 1
      %p157 = por %p155, %p156
      %p159 = scmp.ne.s32.totalorder %s142, %s158
      %p160 = scmp.eq.s32.totalorder %s24, 0
      %p161 = por %p159, %p160
      %p162 = scmp.le.s32.totalorder 1, %s18
      %p163 = scmp.lt.s32.totalorder %s18, 3
      %p164 = pnand %p162, %p163
      %p165 = pneg %p164
      // Predicated region
      $region9: #{tpu_custom_call.1} parent=5 // pred_check
        _
      $region10: #{tpu_custom_call.1} parent=5 // pred_check_branch
        %167 = sbr.rel (%p164) target = $region12
      $region11: #{tpu_custom_call.1} parent=5 // pred_region
        %s168 = ssub.s32 %s18, 1
        // Predicated region
        $region13: #{tpu_custom_call.1} parent=11 // pred_check
          %p169 = pneg %p65
        $region14: #{tpu_custom_call.1} parent=11 // pred_check_branch
          %171 = sbr.rel (%p169) target = $region16
        $region15: #{tpu_custom_call.1} parent=11 // pred_region
          _
        $region16: #{tpu_custom_call.1} parent=11 // pred_fallthru
          _
        // Predicated region
        $region17: #{tpu_custom_call.1} parent=11 // pred_check
          %p172 = pneg %p86
        $region18: #{tpu_custom_call.1} parent=11 // pred_check_branch
          %174 = sbr.rel (%p172) target = $region20
        $region19: #{tpu_custom_call.1} parent=11 // pred_region
          _
        $region20: #{tpu_custom_call.1} parent=11 // pred_fallthru
          _
        // Predicated region
        $region21: #{tpu_custom_call.1} parent=11 // pred_check
          %p175 = pneg %p107
        $region22: #{tpu_custom_call.1} parent=11 // pred_check_branch
          %177 = sbr.rel (%p175) target = $region24
        $region23: #{tpu_custom_call.1} parent=11 // pred_region
          %s179 = ssub.s32 8192, 8192
          %180 = vsyncadd [#allocation6], %s179
          %s181 = sshll.u32 [#allocation5], 4
          %s182 = int_to_ptr.vmem [resolvable:$true] %s181
          %187 = dma.hbm_to_vmem [thread:$0]  %s3, 8192, %s182, [#allocation6], 256, 256, 16
        $region24: #{tpu_custom_call.1} parent=11 // pred_fallthru
          _
        // Predicated region
        $region25: #{tpu_custom_call.1} parent=11 // pred_check
          %p188 = pneg %p128
        $region26: #{tpu_custom_call.1} parent=11 // pred_check_branch
          %190 = sbr.rel (%p188) target = $region28
        $region27: #{tpu_custom_call.1} parent=11 // pred_region
          _
        $region28: #{tpu_custom_call.1} parent=11 // pred_fallthru
          _
      $region12: #{tpu_custom_call.1} parent=5 // pred_fallthru
        _
      %p191 = scmp.lt.s32.totalorder %s18, 2
      // Predicated region
      $region29: #{tpu_custom_call.1} parent=5 // pred_check
        %p192 = pneg %p191
      $region30: #{tpu_custom_call.1} parent=5 // pred_check_branch
        %194 = sbr.rel (%p192) target = $region32
      $region31: #{tpu_custom_call.1} parent=5 // pred_region
        // Predicated region
        $region33: #{tpu_custom_call.1} parent=31 // pred_check
          %p195 = pneg %p38
        $region34: #{tpu_custom_call.1} parent=31 // pred_check_branch
          %197 = sbr.rel (%p195) target = $region36
        $region35: #{tpu_custom_call.1} parent=31 // pred_region
          %s198 = sand.u32 %s28, 1
          %s199 = scalar_lea.sflag [#allocation3], %s198
          %s200 = sand.u32 %s28, 1
          %s201 = smul.addr %s200, 512
          %s202 = scalar_lea.vmem [#allocation2], %s201
          %s203 = smul.u32 32, %s18
          %s204 = ssub.s32 50, %s203
          %p205 = scmp.lt.s32.totalorder %s204, 32
          %s206 = scalar_select %p205, %s204, 32
          %s207 = smul.u32 128, %s206
          %s208 = smul.u32 %s207, 2
          %s210 = ssub.s32 8192, %s208
          %211 = vsyncadd %s199, %s210
          %p212 = scmp.ne.s32.totalorder 0, %s208
          %s213 = smul.addr %s203, 2
          %s214 = smul.addr %s213, 128
          %s215 = scalar_lea.hbm %s0, %s214
          %s216 = smul.u32 16, %s206
          %s217 = sshll.u32 %s202, 4
          %s218 = int_to_ptr.vmem [resolvable:$true] %s217
          %s219 = sshll.u32 %s216, 4
          %223 = dma.hbm_to_vmem [thread:$0]  (%p212), %s215, %s219, %s218, %s199, 256, 256, 16
        $region36: #{tpu_custom_call.1} parent=31 // pred_fallthru
          _
      $region32: #{tpu_custom_call.1} parent=5 // pred_fallthru
        _
      %p224 = scmp.le.s32.totalorder 1, %s18
      %p225 = scmp.lt.s32.totalorder %s18, 3
      %p226 = pnand %p224, %p225
      %p227 = pneg %p226
      // Predicated region
      $region37: #{tpu_custom_call.1} parent=5 // pred_check
        _
      $region38: #{tpu_custom_call.1} parent=5 // pred_check_branch
        %229 = sbr.rel (%p226) target = $region40
      $region39: #{tpu_custom_call.1} parent=5 // pred_region
        %s230 = ssub.s32 %s18, 1
        %s231 = sand.u32 %s31, 1
        %s232 = scalar_lea.sflag [#allocation3], %s231
        %s233 = sand.u32 %s31, 1
        %s234 = smul.addr %s233, 512
        %s235 = scalar_lea.vmem [#allocation2], %s234
        // Predicated region
        $region41: #{tpu_custom_call.1} parent=39 // pred_check
          %p236 = pneg %p44
        $region42: #{tpu_custom_call.1} parent=39 // pred_check_branch
          %238 = sbr.rel (%p236) target = $region44
        $region43: #{tpu_custom_call.1} parent=39 // pred_region
          %239 = dma.done %s232, 8192
        $region44: #{tpu_custom_call.1} parent=39 // pred_fallthru
          _
        // Predicated region
        $region45: #{tpu_custom_call.1} parent=39 // pred_check
          %p240 = pneg %p107
        $region46: #{tpu_custom_call.1} parent=39 // pred_check_branch
          %242 = sbr.rel (%p240) target = $region48
        $region47: #{tpu_custom_call.1} parent=39 // pred_region
          %243 = dma.done [#allocation6], 8192
        $region48: #{tpu_custom_call.1} parent=39 // pred_fallthru
          _
        %s244 = sand.u32 %s31, 1
        %s245 = scalar_lea.sflag [#allocation3], %s244
        %s246 = sand.u32 %s31, 1
        %s247 = smul.addr %s246, 512
        %s248 = scalar_lea.vmem [#allocation2], %s247
        %p249 = pneg %p44
        %p250 = pneg %p41
        %p251 = pneg %p65
        %p252 = pneg %p62
        %p253 = pneg %p86
        %p254 = pneg %p83
        %p255 = pneg %p107
        %p256 = pneg %p104
        %p257 = pneg %p128
        %p258 = pneg %p125
        %p259 = pneg %p154
        %p260 = pneg %p151
        %s261 = sand.u32 %s141, 1
        %s262 = scalar_lea.sflag [#allocation4], %s261
        %s263 = sand.u32 %s141, 1
        %s264 = smul.addr %s263, 512
        %s265 = scalar_lea.vmem [#allocation7], %s264
        %s266 = smul.u32 32, %s23
        %s267 = ssub.s32 50, %s266
        %p268 = scmp.lt.s32.totalorder %s267, 32
        %s269 = scalar_select %p268, %s267, 32
        %s270 = smul.u32 128, %s269
        %s271 = smul.u32 %s270, 2
        %s272 = smul.u32 32, %s23
        %s273 = ssub.s32 50, %s272
        %p274 = scmp.lt.s32.totalorder %s273, 32
        %s275 = scalar_select %p274, %s273, 32
        %s276 = smul.u32 128, %s275
        %s277 = smul.u32 %s276, 2
        %v278 = vld [vmem:[%s235] sm:$0xff]
        %v279 = vld [vmem:[%s235 + $0x8] sm:$0xff]
        %v280 = vld [vmem:[%s235 + $0x10] sm:$0xff]
        %v281 = vld [vmem:[%s235 + $0x18] sm:$0xff]
        %v282 = vld [vmem:[%s235 + $0x20] sm:$0xff]
        %v283 = vld [vmem:[%s235 + $0x28] sm:$0xff]
        %v284 = vld [vmem:[%s235 + $0x30] sm:$0xff]
        %v285 = vld [vmem:[%s235 + $0x38] sm:$0xff]
        %v286 = vld [vmem:[%s235 + $0x40] sm:$0xff]
        %v287 = vld [vmem:[%s235 + $0x48] sm:$0xff]
        %v288 = vld [vmem:[%s235 + $0x50] sm:$0xff]
        %v289 = vld [vmem:[%s235 + $0x58] sm:$0xff]
        %v290 = vld [vmem:[%s235 + $0x60] sm:$0xff]
        %v291 = vld [vmem:[%s235 + $0x68] sm:$0xff]
        %v292 = vld [vmem:[%s235 + $0x70] sm:$0xff]
        %v293 = vld [vmem:[%s235 + $0x78] sm:$0xff]
        %v294 = vld [vmem:[%s235 + $0x80] sm:$0xff]
        %v295 = vld [vmem:[%s235 + $0x88] sm:$0xff]
        %v296 = vld [vmem:[%s235 + $0x90] sm:$0xff]
        %v297 = vld [vmem:[%s235 + $0x98] sm:$0xff]
        %v298 = vld [vmem:[%s235 + $0xa0] sm:$0xff]
        %v299 = vld [vmem:[%s235 + $0xa8] sm:$0xff]
        %v300 = vld [vmem:[%s235 + $0xb0] sm:$0xff]
        %v301 = vld [vmem:[%s235 + $0xb8] sm:$0xff]
        %v302 = vld [vmem:[%s235 + $0xc0] sm:$0xff]
        %v303 = vld [vmem:[%s235 + $0xc8] sm:$0xff]
        %v304 = vld [vmem:[%s235 + $0xd0] sm:$0xff]
        %v305 = vld [vmem:[%s235 + $0xd8] sm:$0xff]
        %v306 = vld [vmem:[%s235 + $0xe0] sm:$0xff]
        %v307 = vld [vmem:[%s235 + $0xe8] sm:$0xff]
        %v308 = vld [vmem:[%s235 + $0xf0] sm:$0xff]
        %v309 = vld [vmem:[%s235 + $0xf8] sm:$0xff]
        %v310 = vld [vmem:[%s235 + $0x100] sm:$0xff]
        %v311 = vld [vmem:[%s235 + $0x108] sm:$0xff]
        %v312 = vld [vmem:[%s235 + $0x110] sm:$0xff]
        %v313 = vld [vmem:[%s235 + $0x118] sm:$0xff]
        %v314 = vld [vmem:[%s235 + $0x120] sm:$0xff]
        %v315 = vld [vmem:[%s235 + $0x128] sm:$0xff]
        %v316 = vld [vmem:[%s235 + $0x130] sm:$0xff]
        %v317 = vld [vmem:[%s235 + $0x138] sm:$0xff]
        %v318 = vld [vmem:[%s235 + $0x140] sm:$0xff]
        %v319 = vld [vmem:[%s235 + $0x148] sm:$0xff]
        %v320 = vld [vmem:[%s235 + $0x150] sm:$0xff]
        %v321 = vld [vmem:[%s235 + $0x158] sm:$0xff]
        %v322 = vld [vmem:[%s235 + $0x160] sm:$0xff]
        %v323 = vld [vmem:[%s235 + $0x168] sm:$0xff]
        %v324 = vld [vmem:[%s235 + $0x170] sm:$0xff]
        %v325 = vld [vmem:[%s235 + $0x178] sm:$0xff]
        %v326 = vld [vmem:[%s235 + $0x180] sm:$0xff]
        %v327 = vld [vmem:[%s235 + $0x188] sm:$0xff]
        %v328 = vld [vmem:[%s235 + $0x190] sm:$0xff]
        %v329 = vld [vmem:[%s235 + $0x198] sm:$0xff]
        %v330 = vld [vmem:[%s235 + $0x1a0] sm:$0xff]
        %v331 = vld [vmem:[%s235 + $0x1a8] sm:$0xff]
        %v332 = vld [vmem:[%s235 + $0x1b0] sm:$0xff]
        %v333 = vld [vmem:[%s235 + $0x1b8] sm:$0xff]
        %v334 = vld [vmem:[%s235 + $0x1c0] sm:$0xff]
        %v335 = vld [vmem:[%s235 + $0x1c8] sm:$0xff]
        %v336 = vld [vmem:[%s235 + $0x1d0] sm:$0xff]
        %v337 = vld [vmem:[%s235 + $0x1d8] sm:$0xff]
        %v338 = vld [vmem:[%s235 + $0x1e0] sm:$0xff]
        %v339 = vld [vmem:[%s235 + $0x1e8] sm:$0xff]
        %v340 = vld [vmem:[%s235 + $0x1f0] sm:$0xff]
        %v341 = vld [vmem:[%s235 + $0x1f8] sm:$0xff]
        %v342 = vadd.f32 %v278, %v279
        %343 = vadd.xlane.f32.xlu0 %v342
        %v344 = vpop.xlane.xlu0 %343
        %v345 = vadd.f32 %v280, %v281
        %346 = vadd.xlane.f32.xlu0 %v345
        %v347 = vpop.xlane.xlu0 %346
        %v348 = vadd.f32 %v282, %v283
        %349 = vadd.xlane.f32.xlu0 %v348
        %v350 = vpop.xlane.xlu0 %349
        %v351 = vadd.f32 %v284, %v285
        %352 = vadd.xlane.f32.xlu0 %v351
        %v353 = vpop.xlane.xlu0 %352
        %v354 = vadd.f32 %v286, %v287
        %355 = vadd.xlane.f32.xlu0 %v354
        %v356 = vpop.xlane.xlu0 %355
        %v357 = vadd.f32 %v288, %v289
        %358 = vadd.xlane.f32.xlu0 %v357
        %v359 = vpop.xlane.xlu0 %358
        %v360 = vadd.f32 %v290, %v291
        %361 = vadd.xlane.f32.xlu0 %v360
        %v362 = vpop.xlane.xlu0 %361
        %v363 = vadd.f32 %v292, %v293
        %364 = vadd.xlane.f32.xlu0 %v363
        %v365 = vpop.xlane.xlu0 %364
        %v366 = vadd.f32 %v294, %v295
        %367 = vadd.xlane.f32.xlu0 %v366
        %v368 = vpop.xlane.xlu0 %367
        %v369 = vadd.f32 %v296, %v297
        %370 = vadd.xlane.f32.xlu0 %v369
        %v371 = vpop.xlane.xlu0 %370
        %v372 = vadd.f32 %v298, %v299
        %373 = vadd.xlane.f32.xlu0 %v372
        %v374 = vpop.xlane.xlu0 %373
        %v375 = vadd.f32 %v300, %v301
        %376 = vadd.xlane.f32.xlu0 %v375
        %v377 = vpop.xlane.xlu0 %376
        %v378 = vadd.f32 %v302, %v303
        %379 = vadd.xlane.f32.xlu0 %v378
        %v380 = vpop.xlane.xlu0 %379
        %v381 = vadd.f32 %v304, %v305
        %382 = vadd.xlane.f32.xlu0 %v381
        %v383 = vpop.xlane.xlu0 %382
        %v384 = vadd.f32 %v306, %v307
        %385 = vadd.xlane.f32.xlu0 %v384
        %v386 = vpop.xlane.xlu0 %385
        %v387 = vadd.f32 %v308, %v309
        %388 = vadd.xlane.f32.xlu0 %v387
        %v389 = vpop.xlane.xlu0 %388
        %v390 = vadd.f32 %v310, %v311
        %391 = vadd.xlane.f32.xlu0 %v390
        %v392 = vpop.xlane.xlu0 %391
        %v393 = vadd.f32 %v312, %v313
        %394 = vadd.xlane.f32.xlu0 %v393
        %v395 = vpop.xlane.xlu0 %394
        %v396 = vadd.f32 %v314, %v315
        %397 = vadd.xlane.f32.xlu0 %v396
        %v398 = vpop.xlane.xlu0 %397
        %v399 = vadd.f32 %v316, %v317
        %400 = vadd.xlane.f32.xlu0 %v399
        %v401 = vpop.xlane.xlu0 %400
        %v402 = vadd.f32 %v318, %v319
        %403 = vadd.xlane.f32.xlu0 %v402
        %v404 = vpop.xlane.xlu0 %403
        %v405 = vadd.f32 %v320, %v321
        %406 = vadd.xlane.f32.xlu0 %v405
        %v407 = vpop.xlane.xlu0 %406
        %v408 = vadd.f32 %v322, %v323
        %409 = vadd.xlane.f32.xlu0 %v408
        %v410 = vpop.xlane.xlu0 %409
        %v411 = vadd.f32 %v324, %v325
        %412 = vadd.xlane.f32.xlu0 %v411
        %v413 = vpop.xlane.xlu0 %412
        %v414 = vadd.f32 %v326, %v327
        %415 = vadd.xlane.f32.xlu0 %v414
        %v416 = vpop.xlane.xlu0 %415
        %v417 = vadd.f32 %v328, %v329
        %418 = vadd.xlane.f32.xlu0 %v417
        %v419 = vpop.xlane.xlu0 %418
        %v420 = vadd.f32 %v330, %v331
        %421 = vadd.xlane.f32.xlu0 %v420
        %v422 = vpop.xlane.xlu0 %421
        %v423 = vadd.f32 %v332, %v333
        %424 = vadd.xlane.f32.xlu0 %v423
        %v425 = vpop.xlane.xlu0 %424
        %v426 = vadd.f32 %v334, %v335
        %427 = vadd.xlane.f32.xlu0 %v426
        %v428 = vpop.xlane.xlu0 %427
        %v429 = vadd.f32 %v336, %v337
        %430 = vadd.xlane.f32.xlu0 %v429
        %v431 = vpop.xlane.xlu0 %430
        %v432 = vadd.f32 %v338, %v339
        %433 = vadd.xlane.f32.xlu0 %v432
        %v434 = vpop.xlane.xlu0 %433
        %v435 = vadd.f32 %v340, %v341
        %436 = vadd.xlane.f32.xlu0 %v435
        %v437 = vpop.xlane.xlu0 %436
        %v438 = vrcp.pop 256.0
        %v439 = vmul.f32 %v344, %v438
        %v440 = vmul.f32 %v347, %v438
        %v441 = vmul.f32 %v350, %v438
        %v442 = vmul.f32 %v353, %v438
        %v443 = vmul.f32 %v356, %v438
        %v444 = vmul.f32 %v359, %v438
        %v445 = vmul.f32 %v362, %v438
        %v446 = vmul.f32 %v365, %v438
        %v447 = vmul.f32 %v368, %v438
        %v448 = vmul.f32 %v371, %v438
        %v449 = vmul.f32 %v374, %v438
        %v450 = vmul.f32 %v377, %v438
        %v451 = vmul.f32 %v380, %v438
        %v452 = vmul.f32 %v383, %v438
        %v453 = vmul.f32 %v386, %v438
        %v454 = vmul.f32 %v389, %v438
        %v455 = vmul.f32 %v392, %v438
        %v456 = vmul.f32 %v395, %v438
        %v457 = vmul.f32 %v398, %v438
        %v458 = vmul.f32 %v401, %v438
        %v459 = vmul.f32 %v404, %v438
        %v460 = vmul.f32 %v407, %v438
        %v461 = vmul.f32 %v410, %v438
        %v462 = vmul.f32 %v413, %v438
        %v463 = vmul.f32 %v416, %v438
        %v464 = vmul.f32 %v419, %v438
        %v465 = vmul.f32 %v422, %v438
        %v466 = vmul.f32 %v425, %v438
        %v467 = vmul.f32 %v428, %v438
        %v468 = vmul.f32 %v431, %v438
        %v469 = vmul.f32 %v434, %v438
        %v470 = vmul.f32 %v437, %v438
        %v471 = vmul.f32 %v278, %v278
        %v472 = vmul.f32 %v279, %v279
        %v473 = vmul.f32 %v280, %v280
        %v474 = vmul.f32 %v281, %v281
        %v475 = vmul.f32 %v282, %v282
        %v476 = vmul.f32 %v283, %v283
        %v477 = vmul.f32 %v284, %v284
        %v478 = vmul.f32 %v285, %v285
        %v479 = vmul.f32 %v286, %v286
        %v480 = vmul.f32 %v287, %v287
        %v481 = vmul.f32 %v288, %v288
        %v482 = vmul.f32 %v289, %v289
        %v483 = vmul.f32 %v290, %v290
        %v484 = vmul.f32 %v291, %v291
        %v485 = vmul.f32 %v292, %v292
        %v486 = vmul.f32 %v293, %v293
        %v487 = vmul.f32 %v294, %v294
        %v488 = vmul.f32 %v295, %v295
        %v489 = vmul.f32 %v296, %v296
        %v490 = vmul.f32 %v297, %v297
        %v491 = vmul.f32 %v298, %v298
        %v492 = vmul.f32 %v299, %v299
        %v493 = vmul.f32 %v300, %v300
        %v494 = vmul.f32 %v301, %v301
        %v495 = vmul.f32 %v302, %v302
        %v496 = vmul.f32 %v303, %v303
        %v497 = vmul.f32 %v304, %v304
        %v498 = vmul.f32 %v305, %v305
        %v499 = vmul.f32 %v306, %v306
        %v500 = vmul.f32 %v307, %v307
        %v501 = vmul.f32 %v308, %v308
        %v502 = vmul.f32 %v309, %v309
        %v503 = vmul.f32 %v310, %v310
        %v504 = vmul.f32 %v311, %v311
        %v505 = vmul.f32 %v312, %v312
        %v506 = vmul.f32 %v313, %v313
        %v507 = vmul.f32 %v314, %v314
        %v508 = vmul.f32 %v315, %v315
        %v509 = vmul.f32 %v316, %v316
        %v510 = vmul.f32 %v317, %v317
        %v511 = vmul.f32 %v318, %v318
        %v512 = vmul.f32 %v319, %v319
        %v513 = vmul.f32 %v320, %v320
        %v514 = vmul.f32 %v321, %v321
        %v515 = vmul.f32 %v322, %v322
        %v516 = vmul.f32 %v323, %v323
        %v517 = vmul.f32 %v324, %v324
        %v518 = vmul.f32 %v325, %v325
        %v519 = vmul.f32 %v326, %v326
        %v520 = vmul.f32 %v327, %v327
        %v521 = vmul.f32 %v328, %v328
        %v522 = vmul.f32 %v329, %v329
        %v523 = vmul.f32 %v330, %v330
        %v524 = vmul.f32 %v331, %v331
        %v525 = vmul.f32 %v332, %v332
        %v526 = vmul.f32 %v333, %v333
        %v527 = vmul.f32 %v334, %v334
        %v528 = vmul.f32 %v335, %v335
        %v529 = vmul.f32 %v336, %v336
        %v530 = vmul.f32 %v337, %v337
        %v531 = vmul.f32 %v338, %v338
        %v532 = vmul.f32 %v339, %v339
        %v533 = vmul.f32 %v340, %v340
        %v534 = vmul.f32 %v341, %v341
        %v535 = vadd.f32 %v471, %v472
        %536 = vadd.xlane.f32.xlu0 %v535
        %v537 = vpop.xlane.xlu0 %536
        %v538 = vadd.f32 %v473, %v474
        %539 = vadd.xlane.f32.xlu0 %v538
        %v540 = vpop.xlane.xlu0 %539
        %v541 = vadd.f32 %v475, %v476
        %542 = vadd.xlane.f32.xlu0 %v541
        %v543 = vpop.xlane.xlu0 %542
        %v544 = vadd.f32 %v477, %v478
        %545 = vadd.xlane.f32.xlu0 %v544
        %v546 = vpop.xlane.xlu0 %545
        %v547 = vadd.f32 %v479, %v480
        %548 = vadd.xlane.f32.xlu0 %v547
        %v549 = vpop.xlane.xlu0 %548
        %v550 = vadd.f32 %v481, %v482
        %551 = vadd.xlane.f32.xlu0 %v550
        %v552 = vpop.xlane.xlu0 %551
        %v553 = vadd.f32 %v483, %v484
        %554 = vadd.xlane.f32.xlu0 %v553
        %v555 = vpop.xlane.xlu0 %554
        %v556 = vadd.f32 %v485, %v486
        %557 = vadd.xlane.f32.xlu0 %v556
        %v558 = vpop.xlane.xlu0 %557
        %v559 = vadd.f32 %v487, %v488
        %560 = vadd.xlane.f32.xlu0 %v559
        %v561 = vpop.xlane.xlu0 %560
        %v562 = vadd.f32 %v489, %v490
        %563 = vadd.xlane.f32.xlu0 %v562
        %v564 = vpop.xlane.xlu0 %563
        %v565 = vadd.f32 %v491, %v492
        %566 = vadd.xlane.f32.xlu0 %v565
        %v567 = vpop.xlane.xlu0 %566
        %v568 = vadd.f32 %v493, %v494
        %569 = vadd.xlane.f32.xlu0 %v568
        %v570 = vpop.xlane.xlu0 %569
        %v571 = vadd.f32 %v495, %v496
        %572 = vadd.xlane.f32.xlu0 %v571
        %v573 = vpop.xlane.xlu0 %572
        %v574 = vadd.f32 %v497, %v498
        %575 = vadd.xlane.f32.xlu0 %v574
        %v576 = vpop.xlane.xlu0 %575
        %v577 = vadd.f32 %v499, %v500
        %578 = vadd.xlane.f32.xlu0 %v577
        %v579 = vpop.xlane.xlu0 %578
        %v580 = vadd.f32 %v501, %v502
        %581 = vadd.xlane.f32.xlu0 %v580
        %v582 = vpop.xlane.xlu0 %581
        %v583 = vadd.f32 %v503, %v504
        %584 = vadd.xlane.f32.xlu0 %v583
        %v585 = vpop.xlane.xlu0 %584
        %v586 = vadd.f32 %v505, %v506
        %587 = vadd.xlane.f32.xlu0 %v586
        %v588 = vpop.xlane.xlu0 %587
        %v589 = vadd.f32 %v507, %v508
        %590 = vadd.xlane.f32.xlu0 %v589
        %v591 = vpop.xlane.xlu0 %590
        %v592 = vadd.f32 %v509, %v510
        %593 = vadd.xlane.f32.xlu0 %v592
        %v594 = vpop.xlane.xlu0 %593
        %v595 = vadd.f32 %v511, %v512
        %596 = vadd.xlane.f32.xlu0 %v595
        %v597 = vpop.xlane.xlu0 %596
        %v598 = vadd.f32 %v513, %v514
        %599 = vadd.xlane.f32.xlu0 %v598
        %v600 = vpop.xlane.xlu0 %599
        %v601 = vadd.f32 %v515, %v516
        %602 = vadd.xlane.f32.xlu0 %v601
        %v603 = vpop.xlane.xlu0 %602
        %v604 = vadd.f32 %v517, %v518
        %605 = vadd.xlane.f32.xlu0 %v604
        %v606 = vpop.xlane.xlu0 %605
        %v607 = vadd.f32 %v519, %v520
        %608 = vadd.xlane.f32.xlu0 %v607
        %v609 = vpop.xlane.xlu0 %608
        %v610 = vadd.f32 %v521, %v522
        %611 = vadd.xlane.f32.xlu0 %v610
        %v612 = vpop.xlane.xlu0 %611
        %v613 = vadd.f32 %v523, %v524
        %614 = vadd.xlane.f32.xlu0 %v613
        %v615 = vpop.xlane.xlu0 %614
        %v616 = vadd.f32 %v525, %v526
        %617 = vadd.xlane.f32.xlu0 %v616
        %v618 = vpop.xlane.xlu0 %617
        %v619 = vadd.f32 %v527, %v528
        %620 = vadd.xlane.f32.xlu0 %v619
        %v621 = vpop.xlane.xlu0 %620
        %v622 = vadd.f32 %v529, %v530
        %623 = vadd.xlane.f32.xlu0 %v622
        %v624 = vpop.xlane.xlu0 %623
        %v625 = vadd.f32 %v531, %v532
        %626 = vadd.xlane.f32.xlu0 %v625
        %v627 = vpop.xlane.xlu0 %626
        %v628 = vadd.f32 %v533, %v534
        %629 = vadd.xlane.f32.xlu0 %v628
        %v630 = vpop.xlane.xlu0 %629
        %v631 = vmul.f32 %v537, %v438
        %v632 = vmul.f32 %v540, %v438
        %v633 = vmul.f32 %v543, %v438
        %v634 = vmul.f32 %v546, %v438
        %v635 = vmul.f32 %v549, %v438
        %v636 = vmul.f32 %v552, %v438
        %v637 = vmul.f32 %v555, %v438
        %v638 = vmul.f32 %v558, %v438
        %v639 = vmul.f32 %v561, %v438
        %v640 = vmul.f32 %v564, %v438
        %v641 = vmul.f32 %v567, %v438
        %v642 = vmul.f32 %v570, %v438
        %v643 = vmul.f32 %v573, %v438
        %v644 = vmul.f32 %v576, %v438
        %v645 = vmul.f32 %v579, %v438
        %v646 = vmul.f32 %v582, %v438
        %v647 = vmul.f32 %v585, %v438
        %v648 = vmul.f32 %v588, %v438
        %v649 = vmul.f32 %v591, %v438
        %v650 = vmul.f32 %v594, %v438
        %v651 = vmul.f32 %v597, %v438
        %v652 = vmul.f32 %v600, %v438
        %v653 = vmul.f32 %v603, %v438
        %v654 = vmul.f32 %v606, %v438
        %v655 = vmul.f32 %v609, %v438
        %v656 = vmul.f32 %v612, %v438
        %v657 = vmul.f32 %v615, %v438
        %v658 = vmul.f32 %v618, %v438
        %v659 = vmul.f32 %v621, %v438
        %v660 = vmul.f32 %v624, %v438
        %v661 = vmul.f32 %v627, %v438
        %v662 = vmul.f32 %v630, %v438
        %v663 = vmul.f32 %v439, %v439
        %v664 = vmul.f32 %v440, %v440
        %v665 = vmul.f32 %v441, %v441
        %v666 = vmul.f32 %v442, %v442
        %v667 = vmul.f32 %v443, %v443
        %v668 = vmul.f32 %v444, %v444
        %v669 = vmul.f32 %v445, %v445
        %v670 = vmul.f32 %v446, %v446
        %v671 = vmul.f32 %v447, %v447
        %v672 = vmul.f32 %v448, %v448
        %v673 = vmul.f32 %v449, %v449
        %v674 = vmul.f32 %v450, %v450
        %v675 = vmul.f32 %v451, %v451
        %v676 = vmul.f32 %v452, %v452
        %v677 = vmul.f32 %v453, %v453
        %v678 = vmul.f32 %v454, %v454
        %v679 = vmul.f32 %v455, %v455
        %v680 = vmul.f32 %v456, %v456
        %v681 = vmul.f32 %v457, %v457
        %v682 = vmul.f32 %v458, %v458
        %v683 = vmul.f32 %v459, %v459
        %v684 = vmul.f32 %v460, %v460
        %v685 = vmul.f32 %v461, %v461
        %v686 = vmul.f32 %v462, %v462
        %v687 = vmul.f32 %v463, %v463
        %v688 = vmul.f32 %v464, %v464
        %v689 = vmul.f32 %v465, %v465
        %v690 = vmul.f32 %v466, %v466
        %v691 = vmul.f32 %v467, %v467
        %v692 = vmul.f32 %v468, %v468
        %v693 = vmul.f32 %v469, %v469
        %v694 = vmul.f32 %v470, %v470
        %v695 = vsub.f32 %v631, %v663
        %v696 = vsub.f32 %v632, %v664
        %v697 = vsub.f32 %v633, %v665
        %v698 = vsub.f32 %v634, %v666
        %v699 = vsub.f32 %v635, %v667
        %v700 = vsub.f32 %v636, %v668
        %v701 = vsub.f32 %v637, %v669
        %v702 = vsub.f32 %v638, %v670
        %v703 = vsub.f32 %v639, %v671
        %v704 = vsub.f32 %v640, %v672
        %v705 = vsub.f32 %v641, %v673
        %v706 = vsub.f32 %v642, %v674
        %v707 = vsub.f32 %v643, %v675
        %v708 = vsub.f32 %v644, %v676
        %v709 = vsub.f32 %v645, %v677
        %v710 = vsub.f32 %v646, %v678
        %v711 = vsub.f32 %v647, %v679
        %v712 = vsub.f32 %v648, %v680
        %v713 = vsub.f32 %v649, %v681
        %v714 = vsub.f32 %v650, %v682
        %v715 = vsub.f32 %v651, %v683
        %v716 = vsub.f32 %v652, %v684
        %v717 = vsub.f32 %v653, %v685
        %v718 = vsub.f32 %v654, %v686
        %v719 = vsub.f32 %v655, %v687
        %v720 = vsub.f32 %v656, %v688
        %v721 = vsub.f32 %v657, %v689
        %v722 = vsub.f32 %v658, %v690
        %v723 = vsub.f32 %v659, %v691
        %v724 = vsub.f32 %v660, %v692
        %v725 = vsub.f32 %v661, %v693
        %v726 = vsub.f32 %v662, %v694
        %v727 = vsub.f32 %v278, %v439
        %v728 = vsub.f32 %v279, %v439
        %v729 = vsub.f32 %v280, %v440
        %v730 = vsub.f32 %v281, %v440
        %v731 = vsub.f32 %v282, %v441
        %v732 = vsub.f32 %v283, %v441
        %v733 = vsub.f32 %v284, %v442
        %v734 = vsub.f32 %v285, %v442
        %v735 = vsub.f32 %v286, %v443
        %v736 = vsub.f32 %v287, %v443
        %v737 = vsub.f32 %v288, %v444
        %v738 = vsub.f32 %v289, %v444
        %v739 = vsub.f32 %v290, %v445
        %v740 = vsub.f32 %v291, %v445
        %v741 = vsub.f32 %v292, %v446
        %v742 = vsub.f32 %v293, %v446
        %v743 = vsub.f32 %v294, %v447
        %v744 = vsub.f32 %v295, %v447
        %v745 = vsub.f32 %v296, %v448
        %v746 = vsub.f32 %v297, %v448
        %v747 = vsub.f32 %v298, %v449
        %v748 = vsub.f32 %v299, %v449
        %v749 = vsub.f32 %v300, %v450
        %v750 = vsub.f32 %v301, %v450
        %v751 = vsub.f32 %v302, %v451
        %v752 = vsub.f32 %v303, %v451
        %v753 = vsub.f32 %v304, %v452
        %v754 = vsub.f32 %v305, %v452
        %v755 = vsub.f32 %v306, %v453
        %v756 = vsub.f32 %v307, %v453
        %v757 = vsub.f32 %v308, %v454
        %v758 = vsub.f32 %v309, %v454
        %v759 = vsub.f32 %v310, %v455
        %v760 = vsub.f32 %v311, %v455
        %v761 = vsub.f32 %v312, %v456
        %v762 = vsub.f32 %v313, %v456
        %v763 = vsub.f32 %v314, %v457
        %v764 = vsub.f32 %v315, %v457
        %v765 = vsub.f32 %v316, %v458
        %v766 = vsub.f32 %v317, %v458
        %v767 = vsub.f32 %v318, %v459
        %v768 = vsub.f32 %v319, %v459
        %v769 = vsub.f32 %v320, %v460
        %v770 = vsub.f32 %v321, %v460
        %v771 = vsub.f32 %v322, %v461
        %v772 = vsub.f32 %v323, %v461
        %v773 = vsub.f32 %v324, %v462
        %v774 = vsub.f32 %v325, %v462
        %v775 = vsub.f32 %v326, %v463
        %v776 = vsub.f32 %v327, %v463
        %v777 = vsub.f32 %v328, %v464
        %v778 = vsub.f32 %v329, %v464
        %v779 = vsub.f32 %v330, %v465
        %v780 = vsub.f32 %v331, %v465
        %v781 = vsub.f32 %v332, %v466
        %v782 = vsub.f32 %v333, %v466
        %v783 = vsub.f32 %v334, %v467
        %v784 = vsub.f32 %v335, %v467
        %v785 = vsub.f32 %v336, %v468
        %v786 = vsub.f32 %v337, %v468
        %v787 = vsub.f32 %v338, %v469
        %v788 = vsub.f32 %v339, %v469
        %v789 = vsub.f32 %v340, %v470
        %v790 = vsub.f32 %v341, %v470
        %v791 = vadd.f32 %v695, 1e-05
        %v792 = vadd.f32 %v696, 1e-05
        %v793 = vadd.f32 %v697, 1e-05
        %v794 = vadd.f32 %v698, 1e-05
        %v795 = vadd.f32 %v699, 1e-05
        %v796 = vadd.f32 %v700, 1e-05
        %v797 = vadd.f32 %v701, 1e-05
        %v798 = vadd.f32 %v702, 1e-05
        %v799 = vadd.f32 %v703, 1e-05
        %v800 = vadd.f32 %v704, 1e-05
        %v801 = vadd.f32 %v705, 1e-05
        %v802 = vadd.f32 %v706, 1e-05
        %v803 = vadd.f32 %v707, 1e-05
        %v804 = vadd.f32 %v708, 1e-05
        %v805 = vadd.f32 %v709, 1e-05
        %v806 = vadd.f32 %v710, 1e-05
        %v807 = vadd.f32 %v711, 1e-05
        %v808 = vadd.f32 %v712, 1e-05
        %v809 = vadd.f32 %v713, 1e-05
        %v810 = vadd.f32 %v714, 1e-05
        %v811 = vadd.f32 %v715, 1e-05
        %v812 = vadd.f32 %v716, 1e-05
        %v813 = vadd.f32 %v717, 1e-05
        %v814 = vadd.f32 %v718, 1e-05
        %v815 = vadd.f32 %v719, 1e-05
        %v816 = vadd.f32 %v720, 1e-05
        %v817 = vadd.f32 %v721, 1e-05
        %v818 = vadd.f32 %v722, 1e-05
        %v819 = vadd.f32 %v723, 1e-05
        %v820 = vadd.f32 %v724, 1e-05
        %v821 = vadd.f32 %v725, 1e-05
        %v822 = vadd.f32 %v726, 1e-05
        %v823 = vrsqrt.pop %v791
        %v824 = vrsqrt.pop %v792
        %v825 = vrsqrt.pop %v793
        %v826 = vrsqrt.pop %v794
        %v827 = vrsqrt.pop %v795
        %v828 = vrsqrt.pop %v796
        %v829 = vrsqrt.pop %v797
        %v830 = vrsqrt.pop %v798
        %v831 = vrsqrt.pop %v799
        %v832 = vrsqrt.pop %v800
        %v833 = vrsqrt.pop %v801
        %v834 = vrsqrt.pop %v802
        %v835 = vrsqrt.pop %v803
        %v836 = vrsqrt.pop %v804
        %v837 = vrsqrt.pop %v805
        %v838 = vrsqrt.pop %v806
        %v839 = vrsqrt.pop %v807
        %v840 = vrsqrt.pop %v808
        %v841 = vrsqrt.pop %v809
        %v842 = vrsqrt.pop %v810
        %v843 = vrsqrt.pop %v811
        %v844 = vrsqrt.pop %v812
        %v845 = vrsqrt.pop %v813
        %v846 = vrsqrt.pop %v814
        %v847 = vrsqrt.pop %v815
        %v848 = vrsqrt.pop %v816
        %v849 = vrsqrt.pop %v817
        %v850 = vrsqrt.pop %v818
        %v851 = vrsqrt.pop %v819
        %v852 = vrsqrt.pop %v820
        %v853 = vrsqrt.pop %v821
        %v854 = vrsqrt.pop %v822
        %v855 = vmul.f32 %v727, %v823
        %v856 = vmul.f32 %v728, %v823
        %v857 = vmul.f32 %v729, %v824
        %v858 = vmul.f32 %v730, %v824
        %v859 = vmul.f32 %v731, %v825
        %v860 = vmul.f32 %v732, %v825
        %v861 = vmul.f32 %v733, %v826
        %v862 = vmul.f32 %v734, %v826
        %v863 = vmul.f32 %v735, %v827
        %v864 = vmul.f32 %v736, %v827
        %v865 = vmul.f32 %v737, %v828
        %v866 = vmul.f32 %v738, %v828
        %v867 = vmul.f32 %v739, %v829
        %v868 = vmul.f32 %v740, %v829
        %v869 = vmul.f32 %v741, %v830
        %v870 = vmul.f32 %v742, %v830
        %v871 = vmul.f32 %v743, %v831
        %v872 = vmul.f32 %v744, %v831
        %v873 = vmul.f32 %v745, %v832
        %v874 = vmul.f32 %v746, %v832
        %v875 = vmul.f32 %v747, %v833
        %v876 = vmul.f32 %v748, %v833
        %v877 = vmul.f32 %v749, %v834
        %v878 = vmul.f32 %v750, %v834
        %v879 = vmul.f32 %v751, %v835
        %v880 = vmul.f32 %v752, %v835
        %v881 = vmul.f32 %v753, %v836
        %v882 = vmul.f32 %v754, %v836
        %v883 = vmul.f32 %v755, %v837
        %v884 = vmul.f32 %v756, %v837
        %v885 = vmul.f32 %v757, %v838
        %v886 = vmul.f32 %v758, %v838
        %v887 = vmul.f32 %v759, %v839
        %v888 = vmul.f32 %v760, %v839
        %v889 = vmul.f32 %v761, %v840
        %v890 = vmul.f32 %v762, %v840
        %v891 = vmul.f32 %v763, %v841
        %v892 = vmul.f32 %v764, %v841
        %v893 = vmul.f32 %v765, %v842
        %v894 = vmul.f32 %v766, %v842
        %v895 = vmul.f32 %v767, %v843
        %v896 = vmul.f32 %v768, %v843
        %v897 = vmul.f32 %v769, %v844
        %v898 = vmul.f32 %v770, %v844
        %v899 = vmul.f32 %v771, %v845
        %v900 = vmul.f32 %v772, %v845
        %v901 = vmul.f32 %v773, %v846
        %v902 = vmul.f32 %v774, %v846
        %v903 = vmul.f32 %v775, %v847
        %v904 = vmul.f32 %v776, %v847
        %v905 = vmul.f32 %v777, %v848
        %v906 = vmul.f32 %v778, %v848
        %v907 = vmul.f32 %v779, %v849
        %v908 = vmul.f32 %v780, %v849
        %v909 = vmul.f32 %v781, %v850
        %v910 = vmul.f32 %v782, %v850
        %v911 = vmul.f32 %v783, %v851
        %v912 = vmul.f32 %v784, %v851
        %v913 = vmul.f32 %v785, %v852
        %v914 = vmul.f32 %v786, %v852
        %v915 = vmul.f32 %v787, %v853
        %v916 = vmul.f32 %v788, %v853
        %v917 = vmul.f32 %v789, %v854
        %v918 = vmul.f32 %v790, %v854
        %v919 = vld [vmem:[%s1] sm:$0x3]
        %v921 = vlaneseq
        %v922 = vshrl.u32 %v921, 7
        %v923 = vsub.s32 0, %v922
        %v924 = vrot.slane %v919, %v923
        %v925 = vlaneseq
        %v926 = vshrl.u32 %v925, 7
        %v927 = vsub.s32 1, %v926
        %v928 = vrot.slane %v919, %v927
        %v931 = vmul.f32 %v855, %v924
        %v932 = vmul.f32 %v856, %v928
        %v933 = vmul.f32 %v857, %v924
        %v934 = vmul.f32 %v858, %v928
        %v935 = vmul.f32 %v859, %v924
        %v936 = vmul.f32 %v860, %v928
        %v937 = vmul.f32 %v861, %v924
        %v938 = vmul.f32 %v862, %v928
        %v939 = vmul.f32 %v863, %v924
        %v940 = vmul.f32 %v864, %v928
        %v941 = vmul.f32 %v865, %v924
        %v942 = vmul.f32 %v866, %v928
        %v943 = vmul.f32 %v867, %v924
        %v944 = vmul.f32 %v868, %v928
        %v945 = vmul.f32 %v869, %v924
        %v946 = vmul.f32 %v870, %v928
        %v947 = vmul.f32 %v871, %v924
        %v948 = vmul.f32 %v872, %v928
        %v949 = vmul.f32 %v873, %v924
        %v950 = vmul.f32 %v874, %v928
        %v951 = vmul.f32 %v875, %v924
        %v952 = vmul.f32 %v876, %v928
        %v953 = vmul.f32 %v877, %v924
        %v954 = vmul.f32 %v878, %v928
        %v955 = vmul.f32 %v879, %v924
        %v956 = vmul.f32 %v880, %v928
        %v957 = vmul.f32 %v881, %v924
        %v958 = vmul.f32 %v882, %v928
        %v959 = vmul.f32 %v883, %v924
        %v960 = vmul.f32 %v884, %v928
        %v961 = vmul.f32 %v885, %v924
        %v962 = vmul.f32 %v886, %v928
        %v963 = vmul.f32 %v887, %v924
        %v964 = vmul.f32 %v888, %v928
        %v965 = vmul.f32 %v889, %v924
        %v966 = vmul.f32 %v890, %v928
        %v967 = vmul.f32 %v891, %v924
        %v968 = vmul.f32 %v892, %v928
        %v969 = vmul.f32 %v893, %v924
        %v970 = vmul.f32 %v894, %v928
        %v971 = vmul.f32 %v895, %v924
        %v972 = vmul.f32 %v896, %v928
        %v973 = vmul.f32 %v897, %v924
        %v974 = vmul.f32 %v898, %v928
        %v975 = vmul.f32 %v899, %v924
        %v976 = vmul.f32 %v900, %v928
        %v977 = vmul.f32 %v901, %v924
        %v978 = vmul.f32 %v902, %v928
        %v979 = vmul.f32 %v903, %v924
        %v980 = vmul.f32 %v904, %v928
        %v981 = vmul.f32 %v905, %v924
        %v982 = vmul.f32 %v906, %v928
        %v983 = vmul.f32 %v907, %v924
        %v984 = vmul.f32 %v908, %v928
        %v985 = vmul.f32 %v909, %v924
        %v986 = vmul.f32 %v910, %v928
        %v987 = vmul.f32 %v911, %v924
        %v988 = vmul.f32 %v912, %v928
        %v989 = vmul.f32 %v913, %v924
        %v990 = vmul.f32 %v914, %v928
        %v991 = vmul.f32 %v915, %v924
        %v992 = vmul.f32 %v916, %v928
        %v993 = vmul.f32 %v917, %v924
        %v994 = vmul.f32 %v918, %v928
        %v995 = vld [vmem:[%s2] sm:$0x3]
        %v997 = vlaneseq
        %v998 = vshrl.u32 %v997, 7
        %v999 = vsub.s32 0, %v998
        %v1000 = vrot.slane %v995, %v999
        %v1001 = vlaneseq
        %v1002 = vshrl.u32 %v1001, 7
        %v1003 = vsub.s32 1, %v1002
        %v1004 = vrot.slane %v995, %v1003
        %v1007 = vadd.f32 %v931, %v1000
        %v1008 = vadd.f32 %v932, %v1004
        %v1009 = vadd.f32 %v933, %v1000
        %v1010 = vadd.f32 %v934, %v1004
        %v1011 = vadd.f32 %v935, %v1000
        %v1012 = vadd.f32 %v936, %v1004
        %v1013 = vadd.f32 %v937, %v1000
        %v1014 = vadd.f32 %v938, %v1004
        %v1015 = vadd.f32 %v939, %v1000
        %v1016 = vadd.f32 %v940, %v1004
        %v1017 = vadd.f32 %v941, %v1000
        %v1018 = vadd.f32 %v942, %v1004
        %v1019 = vadd.f32 %v943, %v1000
        %v1020 = vadd.f32 %v944, %v1004
        %v1021 = vadd.f32 %v945, %v1000
        %v1022 = vadd.f32 %v946, %v1004
        %v1023 = vadd.f32 %v947, %v1000
        %v1024 = vadd.f32 %v948, %v1004
        %v1025 = vadd.f32 %v949, %v1000
        %v1026 = vadd.f32 %v950, %v1004
        %v1027 = vadd.f32 %v951, %v1000
        %v1028 = vadd.f32 %v952, %v1004
        %v1029 = vadd.f32 %v953, %v1000
        %v1030 = vadd.f32 %v954, %v1004
        %v1031 = vadd.f32 %v955, %v1000
        %v1032 = vadd.f32 %v956, %v1004
        %v1033 = vadd.f32 %v957, %v1000
        %v1034 = vadd.f32 %v958, %v1004
        %v1035 = vadd.f32 %v959, %v1000
        %v1036 = vadd.f32 %v960, %v1004
        %v1037 = vadd.f32 %v961, %v1000
        %v1038 = vadd.f32 %v962, %v1004
        %v1039 = vadd.f32 %v963, %v1000
        %v1040 = vadd.f32 %v964, %v1004
        %v1041 = vadd.f32 %v965, %v1000
        %v1042 = vadd.f32 %v966, %v1004
        %v1043 = vadd.f32 %v967, %v1000
        %v1044 = vadd.f32 %v968, %v1004
        %v1045 = vadd.f32 %v969, %v1000
        %v1046 = vadd.f32 %v970, %v1004
        %v1047 = vadd.f32 %v971, %v1000
        %v1048 = vadd.f32 %v972, %v1004
        %v1049 = vadd.f32 %v973, %v1000
        %v1050 = vadd.f32 %v974, %v1004
        %v1051 = vadd.f32 %v975, %v1000
        %v1052 = vadd.f32 %v976, %v1004
        %v1053 = vadd.f32 %v977, %v1000
        %v1054 = vadd.f32 %v978, %v1004
        %v1055 = vadd.f32 %v979, %v1000
        %v1056 = vadd.f32 %v980, %v1004
        %v1057 = vadd.f32 %v981, %v1000
        %v1058 = vadd.f32 %v982, %v1004
        %v1059 = vadd.f32 %v983, %v1000
        %v1060 = vadd.f32 %v984, %v1004
        %v1061 = vadd.f32 %v985, %v1000
        %v1062 = vadd.f32 %v986, %v1004
        %v1063 = vadd.f32 %v987, %v1000
        %v1064 = vadd.f32 %v988, %v1004
        %v1065 = vadd.f32 %v989, %v1000
        %v1066 = vadd.f32 %v990, %v1004
        %v1067 = vadd.f32 %v991, %v1000
        %v1068 = vadd.f32 %v992, %v1004
        %v1069 = vadd.f32 %v993, %v1000
        %v1070 = vadd.f32 %v994, %v1004
        %v1071 = vld [vmem:[#allocation5] sm:$0xff]
        %v1072 = vld [vmem:[#allocation5 + $0x8] sm:$0xff]
        %v1073 = vld [vmem:[#allocation5 + $0x10] sm:$0xff]
        %v1074 = vld [vmem:[#allocation5 + $0x18] sm:$0xff]
        %v1075 = vld [vmem:[#allocation5 + $0x20] sm:$0xff]
        %v1076 = vld [vmem:[#allocation5 + $0x28] sm:$0xff]
        %v1077 = vld [vmem:[#allocation5 + $0x30] sm:$0xff]
        %v1078 = vld [vmem:[#allocation5 + $0x38] sm:$0xff]
        %v1079 = vld [vmem:[#allocation5 + $0x40] sm:$0xff]
        %v1080 = vld [vmem:[#allocation5 + $0x48] sm:$0xff]
        %v1081 = vld [vmem:[#allocation5 + $0x50] sm:$0xff]
        %v1082 = vld [vmem:[#allocation5 + $0x58] sm:$0xff]
        %v1083 = vld [vmem:[#allocation5 + $0x60] sm:$0xff]
        %v1084 = vld [vmem:[#allocation5 + $0x68] sm:$0xff]
        %v1085 = vld [vmem:[#allocation5 + $0x70] sm:$0xff]
        %v1086 = vld [vmem:[#allocation5 + $0x78] sm:$0xff]
        %v1087 = vld [vmem:[#allocation5 + $0x80] sm:$0xff]
        %v1088 = vld [vmem:[#allocation5 + $0x88] sm:$0xff]
        %v1089 = vld [vmem:[#allocation5 + $0x90] sm:$0xff]
        %v1090 = vld [vmem:[#allocation5 + $0x98] sm:$0xff]
        %v1091 = vld [vmem:[#allocation5 + $0xa0] sm:$0xff]
        %v1092 = vld [vmem:[#allocation5 + $0xa8] sm:$0xff]
        %v1093 = vld [vmem:[#allocation5 + $0xb0] sm:$0xff]
        %v1094 = vld [vmem:[#allocation5 + $0xb8] sm:$0xff]
        %v1095 = vld [vmem:[#allocation5 + $0xc0] sm:$0xff]
        %v1096 = vld [vmem:[#allocation5 + $0xc8] sm:$0xff]
        %v1097 = vld [vmem:[#allocation5 + $0xd0] sm:$0xff]
        %v1098 = vld [vmem:[#allocation5 + $0xd8] sm:$0xff]
        %v1099 = vld [vmem:[#allocation5 + $0xe0] sm:$0xff]
        %v1100 = vld [vmem:[#allocation5 + $0xe8] sm:$0xff]
        %v1101 = vld [vmem:[#allocation5 + $0xf0] sm:$0xff]
        %v1102 = vld [vmem:[#allocation5 + $0xf8] sm:$0xff]
        %v1103 = vld [vmem:[#allocation5 + $0x100] sm:$0xff]
        %v1104 = vld [vmem:[#allocation5 + $0x108] sm:$0xff]
        %v1105 = vld [vmem:[#allocation5 + $0x110] sm:$0xff]
        %v1106 = vld [vmem:[#allocation5 + $0x118] sm:$0xff]
        %v1107 = vld [vmem:[#allocation5 + $0x120] sm:$0xff]
        %v1108 = vld [vmem:[#allocation5 + $0x128] sm:$0xff]
        %v1109 = vld [vmem:[#allocation5 + $0x130] sm:$0xff]
        %v1110 = vld [vmem:[#allocation5 + $0x138] sm:$0xff]
        %v1111 = vld [vmem:[#allocation5 + $0x140] sm:$0xff]
        %v1112 = vld [vmem:[#allocation5 + $0x148] sm:$0xff]
        %v1113 = vld [vmem:[#allocation5 + $0x150] sm:$0xff]
        %v1114 = vld [vmem:[#allocation5 + $0x158] sm:$0xff]
        %v1115 = vld [vmem:[#allocation5 + $0x160] sm:$0xff]
        %v1116 = vld [vmem:[#allocation5 + $0x168] sm:$0xff]
        %v1117 = vld [vmem:[#allocation5 + $0x170] sm:$0xff]
        %v1118 = vld [vmem:[#allocation5 + $0x178] sm:$0xff]
        %v1119 = vld [vmem:[#allocation5 + $0x180] sm:$0xff]
        %v1120 = vld [vmem:[#allocation5 + $0x188] sm:$0xff]
        %v1121 = vld [vmem:[#allocation5 + $0x190] sm:$0xff]
        %v1122 = vld [vmem:[#allocation5 + $0x198] sm:$0xff]
        %v1123 = vld [vmem:[#allocation5 + $0x1a0] sm:$0xff]
        %v1124 = vld [vmem:[#allocation5 + $0x1a8] sm:$0xff]
        %v1125 = vld [vmem:[#allocation5 + $0x1b0] sm:$0xff]
        %v1126 = vld [vmem:[#allocation5 + $0x1b8] sm:$0xff]
        %v1127 = vld [vmem:[#allocation5 + $0x1c0] sm:$0xff]
        %v1128 = vld [vmem:[#allocation5 + $0x1c8] sm:$0xff]
        %v1129 = vld [vmem:[#allocation5 + $0x1d0] sm:$0xff]
        %v1130 = vld [vmem:[#allocation5 + $0x1d8] sm:$0xff]
        %v1131 = vld [vmem:[#allocation5 + $0x1e0] sm:$0xff]
        %v1132 = vld [vmem:[#allocation5 + $0x1e8] sm:$0xff]
        %v1133 = vld [vmem:[#allocation5 + $0x1f0] sm:$0xff]
        %v1134 = vld [vmem:[#allocation5 + $0x1f8] sm:$0xff]
        %v1135 = vld [vmem:[%s4] sm:$0x3]
        %v1137 = vlaneseq
        %v1138 = vshrl.u32 %v1137, 7
        %v1139 = vsub.s32 0, %v1138
        %v1140 = vrot.slane %v1135, %v1139
        %v1141 = vlaneseq
        %v1142 = vshrl.u32 %v1141, 7
        %v1143 = vsub.s32 1, %v1142
        %v1144 = vrot.slane %v1135, %v1143
        %1147 = vmatprep.subr.mxu0 %v1072
        %1148 = vmatpush1.msra.mxu0 %v1071
        %1149 = vmatprep.subr.mxu0 %v1074
        %1150 = vmatpush1.msra.mxu0 %v1073
        %1151 = vmatprep.subr.mxu0 %v1076
        %1152 = vmatpush1.msra.mxu0 %v1075
        %1153 = vmatprep.subr.mxu0 %v1078
        %1154 = vmatpush1.msra.mxu0 %v1077
        %1155 = vmatprep.subr.mxu0 %v1080
        %1156 = vmatpush1.msra.mxu0 %v1079
        %1157 = vmatprep.subr.mxu0 %v1082
        %1158 = vmatpush1.msra.mxu0 %v1081
        %1159 = vmatprep.subr.mxu0 %v1084
        %1160 = vmatpush1.msra.mxu0 %v1083
        %1161 = vmatprep.subr.mxu0 %v1086
        %1162 = vmatpush1.msra.mxu0 %v1085
        %1163 = vmatprep.subr.mxu0 %v1088
        %1164 = vmatpush1.msra.mxu0 %v1087
        %1165 = vmatprep.subr.mxu0 %v1090
        %1166 = vmatpush1.msra.mxu0 %v1089
        %1167 = vmatprep.subr.mxu0 %v1092
        %1168 = vmatpush1.msra.mxu0 %v1091
        %1169 = vmatprep.subr.mxu0 %v1094
        %1170 = vmatpush1.msra.mxu0 %v1093
        %1171 = vmatprep.subr.mxu0 %v1096
        %1172 = vmatpush1.msra.mxu0 %v1095
        %1173 = vmatprep.subr.mxu0 %v1098
        %1174 = vmatpush1.msra.mxu0 %v1097
        %1175 = vmatprep.subr.mxu0 %v1100
        %1176 = vmatpush1.msra.mxu0 %v1099
        %1177 = vmatprep.subr.mxu0 %v1102
        %1178 = vmatpush1.msra.mxu0 %v1101
        %1179 = vmatprep.subr.mxu0 %v1104
        %1180 = vmatpush1.msra.mxu0 %v1103
        %1181 = vmatprep.subr.mxu0 %v1106
        %1182 = vmatpush1.msra.mxu0 %v1105
        %1183 = vmatprep.subr.mxu0 %v1108
        %1184 = vmatpush1.msra.mxu0 %v1107
        %1185 = vmatprep.subr.mxu0 %v1110
        %1186 = vmatpush1.msra.mxu0 %v1109
        %1187 = vmatprep.subr.mxu0 %v1112
        %1188 = vmatpush1.msra.mxu0 %v1111
        %1189 = vmatprep.subr.mxu0 %v1114
        %1190 = vmatpush1.msra.mxu0 %v1113
        %1191 = vmatprep.subr.mxu0 %v1116
        %1192 = vmatpush1.msra.mxu0 %v1115
        %1193 = vmatprep.subr.mxu0 %v1118
        %1194 = vmatpush1.msra.mxu0 %v1117
        %1195 = vmatprep.subr.mxu0 %v1120
        %1196 = vmatpush1.msra.mxu0 %v1119
        %1197 = vmatprep.subr.mxu0 %v1122
        %1198 = vmatpush1.msra.mxu0 %v1121
        %1199 = vmatprep.subr.mxu0 %v1124
        %1200 = vmatpush1.msra.mxu0 %v1123
        %1201 = vmatprep.subr.mxu0 %v1126
        %1202 = vmatpush1.msra.mxu0 %v1125
        %1203 = vmatprep.subr.mxu0 %v1128
        %1204 = vmatpush1.msra.mxu0 %v1127
        %1205 = vmatprep.subr.mxu0 %v1130
        %1206 = vmatpush1.msra.mxu0 %v1129
        %1207 = vmatprep.subr.mxu0 %v1132
        %1208 = vmatpush1.msra.mxu0 %v1131
        %1209 = vmatprep.subr.mxu0 %v1134
        %1210 = vmatpush1.msra.mxu0 %v1133
        %1211 = vmatprep.mubr.f32.mxu0 %v1008
        %1212 = vmatmul.mubr.f32.gmra.mrb[0].mxu0 %v1007
        %v1213 = vpop.f32.mrb[0].mxu0
        %v1214 = vadd.f32 %v1140, %v1213
        %v1215 = vpop.f32.mrb[0].mxu0
        %v1216 = vadd.f32 %v1144, %v1215
        %1217 = vmatprep.mubr.f32.mxu0 %v1010
        %1218 = vmatmul.mubr.f32.gmra.mrb[0].mxu0 %v1009
        %v1219 = vpop.f32.mrb[0].mxu0
        %v1220 = vadd.f32 %v1140, %v1219
        %v1221 = vpop.f32.mrb[0].mxu0
        %v1222 = vadd.f32 %v1144, %v1221
        %1223 = vmatprep.mubr.f32.mxu0 %v1012
        %1224 = vmatmul.mubr.f32.gmra.mrb[0].mxu0 %v1011
        %v1225 = vpop.f32.mrb[0].mxu0
        %v1226 = vadd.f32 %v1140, %v1225
        %v1227 = vpop.f32.mrb[0].mxu0
        %v1228 = vadd.f32 %v1144, %v1227
        %1229 = vmatprep.mubr.f32.mxu0 %v1014
        %1230 = vmatmul.mubr.f32.gmra.mrb[0].mxu0 %v1013
        %v1231 = vpop.f32.mrb[0].mxu0
        %v1232 = vadd.f32 %v1140, %v1231
        %v1233 = vpop.f32.mrb[0].mxu0
        %v1234 = vadd.f32 %v1144, %v1233
        %1235 = vmatprep.mubr.f32.mxu0 %v1016
        %1236 = vmatmul.mubr.f32.gmra.mrb[0].mxu0 %v1015
        %v1237 = vpop.f32.mrb[0].mxu0
        %v1238 = vadd.f32 %v1140, %v1237
        %v1239 = vpop.f32.mrb[0].mxu0
        %v1240 = vadd.f32 %v1144, %v1239
        %1241 = vmatprep.mubr.f32.mxu0 %v1018
        %1242 = vmatmul.mubr.f32.gmra.mrb[0].mxu0 %v1017
        %v1243 = vpop.f32.mrb[0].mxu0
        %v1244 = vadd.f32 %v1140, %v1243
        %v1245 = vpop.f32.mrb[0].mxu0
        %v1246 = vadd.f32 %v1144, %v1245
        %1247 = vmatprep.mubr.f32.mxu0 %v1020
        %1248 = vmatmul.mubr.f32.gmra.mrb[0].mxu0 %v1019
        %v1249 = vpop.f32.mrb[0].mxu0
        %v1250 = vadd.f32 %v1140, %v1249
        %v1251 = vpop.f32.mrb[0].mxu0
        %v1252 = vadd.f32 %v1144, %v1251
        %1253 = vmatprep.mubr.f32.mxu0 %v1022
        %1254 = vmatmul.mubr.f32.gmra.mrb[0].mxu0 %v1021
        %v1255 = vpop.f32.mrb[0].mxu0
        %v1256 = vadd.f32 %v1140, %v1255
        %v1257 = vpop.f32.mrb[0].mxu0
        %v1258 = vadd.f32 %v1144, %v1257
        %1259 = vmatprep.mubr.f32.mxu0 %v1024
        %1260 = vmatmul.mubr.f32.gmra.mrb[0].mxu0 %v1023
        %v1261 = vpop.f32.mrb[0].mxu0
        %v1262 = vadd.f32 %v1140, %v1261
        %v1263 = vpop.f32.mrb[0].mxu0
        %v1264 = vadd.f32 %v1144, %v1263
        %1265 = vmatprep.mubr.f32.mxu0 %v1026
        %1266 = vmatmul.mubr.f32.gmra.mrb[0].mxu0 %v1025
        %v1267 = vpop.f32.mrb[0].mxu0
        %v1268 = vadd.f32 %v1140, %v1267
        %v1269 = vpop.f32.mrb[0].mxu0
        %v1270 = vadd.f32 %v1144, %v1269
        %1271 = vmatprep.mubr.f32.mxu0 %v1028
        %1272 = vmatmul.mubr.f32.gmra.mrb[0].mxu0 %v1027
        %v1273 = vpop.f32.mrb[0].mxu0
        %v1274 = vadd.f32 %v1140, %v1273
        %v1275 = vpop.f32.mrb[0].mxu0
        %v1276 = vadd.f32 %v1144, %v1275
        %1277 = vmatprep.mubr.f32.mxu0 %v1030
        %1278 = vmatmul.mubr.f32.gmra.mrb[0].mxu0 %v1029
        %v1279 = vpop.f32.mrb[0].mxu0
        %v1280 = vadd.f32 %v1140, %v1279
        %v1281 = vpop.f32.mrb[0].mxu0
        %v1282 = vadd.f32 %v1144, %v1281
        %1283 = vmatprep.mubr.f32.mxu0 %v1032
        %1284 = vmatmul.mubr.f32.gmra.mrb[0].mxu0 %v1031
        %v1285 = vpop.f32.mrb[0].mxu0
        %v1286 = vadd.f32 %v1140, %v1285
        %v1287 = vpop.f32.mrb[0].mxu0
        %v1288 = vadd.f32 %v1144, %v1287
        %1289 = vmatprep.mubr.f32.mxu0 %v1034
        %1290 = vmatmul.mubr.f32.gmra.mrb[0].mxu0 %v1033
        %v1291 = vpop.f32.mrb[0].mxu0
        %v1292 = vadd.f32 %v1140, %v1291
        %v1293 = vpop.f32.mrb[0].mxu0
        %v1294 = vadd.f32 %v1144, %v1293
        %1295 = vmatprep.mubr.f32.mxu0 %v1036
        %1296 = vmatmul.mubr.f32.gmra.mrb[0].mxu0 %v1035
        %v1297 = vpop.f32.mrb[0].mxu0
        %v1298 = vadd.f32 %v1140, %v1297
        %v1299 = vpop.f32.mrb[0].mxu0
        %v1300 = vadd.f32 %v1144, %v1299
        %1301 = vmatprep.mubr.f32.mxu0 %v1038
        %1302 = vmatmul.mubr.f32.gmra.mrb[0].mxu0 %v1037
        %v1303 = vpop.f32.mrb[0].mxu0
        %v1304 = vadd.f32 %v1140, %v1303
        %v1305 = vpop.f32.mrb[0].mxu0
        %v1306 = vadd.f32 %v1144, %v1305
        %1307 = vmatprep.mubr.f32.mxu0 %v1040
        %1308 = vmatmul.mubr.f32.gmra.mrb[0].mxu0 %v1039
        %v1309 = vpop.f32.mrb[0].mxu0
        %v1310 = vadd.f32 %v1140, %v1309
        %v1311 = vpop.f32.mrb[0].mxu0
        %v1312 = vadd.f32 %v1144, %v1311
        %1313 = vmatprep.mubr.f32.mxu0 %v1042
        %1314 = vmatmul.mubr.f32.gmra.mrb[0].mxu0 %v1041
        %v1315 = vpop.f32.mrb[0].mxu0
        %v1316 = vadd.f32 %v1140, %v1315
        %v1317 = vpop.f32.mrb[0].mxu0
        %v1318 = vadd.f32 %v1144, %v1317
        %1319 = vmatprep.mubr.f32.mxu0 %v1044
        %1320 = vmatmul.mubr.f32.gmra.mrb[0].mxu0 %v1043
        %v1321 = vpop.f32.mrb[0].mxu0
        %v1322 = vadd.f32 %v1140, %v1321
        %v1323 = vpop.f32.mrb[0].mxu0
        %v1324 = vadd.f32 %v1144, %v1323
        %1325 = vmatprep.mubr.f32.mxu0 %v1046
        %1326 = vmatmul.mubr.f32.gmra.mrb[0].mxu0 %v1045
        %v1327 = vpop.f32.mrb[0].mxu0
        %v1328 = vadd.f32 %v1140, %v1327
        %v1329 = vpop.f32.mrb[0].mxu0
        %v1330 = vadd.f32 %v1144, %v1329
        %1331 = vmatprep.mubr.f32.mxu0 %v1048
        %1332 = vmatmul.mubr.f32.gmra.mrb[0].mxu0 %v1047
        %v1333 = vpop.f32.mrb[0].mxu0
        %v1334 = vadd.f32 %v1140, %v1333
        %v1335 = vpop.f32.mrb[0].mxu0
        %v1336 = vadd.f32 %v1144, %v1335
        %1337 = vmatprep.mubr.f32.mxu0 %v1050
        %1338 = vmatmul.mubr.f32.gmra.mrb[0].mxu0 %v1049
        %v1339 = vpop.f32.mrb[0].mxu0
        %v1340 = vadd.f32 %v1140, %v1339
        %v1341 = vpop.f32.mrb[0].mxu0
        %v1342 = vadd.f32 %v1144, %v1341
        %1343 = vmatprep.mubr.f32.mxu0 %v1052
        %1344 = vmatmul.mubr.f32.gmra.mrb[0].mxu0 %v1051
        %v1345 = vpop.f32.mrb[0].mxu0
        %v1346 = vadd.f32 %v1140, %v1345
        %v1347 = vpop.f32.mrb[0].mxu0
        %v1348 = vadd.f32 %v1144, %v1347
        %1349 = vmatprep.mubr.f32.mxu0 %v1054
        %1350 = vmatmul.mubr.f32.gmra.mrb[0].mxu0 %v1053
        %v1351 = vpop.f32.mrb[0].mxu0
        %v1352 = vadd.f32 %v1140, %v1351
        %v1353 = vpop.f32.mrb[0].mxu0
        %v1354 = vadd.f32 %v1144, %v1353
        %1355 = vmatprep.mubr.f32.mxu0 %v1056
        %1356 = vmatmul.mubr.f32.gmra.mrb[0].mxu0 %v1055
        %v1357 = vpop.f32.mrb[0].mxu0
        %v1358 = vadd.f32 %v1140, %v1357
        %v1359 = vpop.f32.mrb[0].mxu0
        %v1360 = vadd.f32 %v1144, %v1359
        %1361 = vmatprep.mubr.f32.mxu0 %v1058
        %1362 = vmatmul.mubr.f32.gmra.mrb[0].mxu0 %v1057
        %v1363 = vpop.f32.mrb[0].mxu0
        %v1364 = vadd.f32 %v1140, %v1363
        %v1365 = vpop.f32.mrb[0].mxu0
        %v1366 = vadd.f32 %v1144, %v1365
        %1367 = vmatprep.mubr.f32.mxu0 %v1060
        %1368 = vmatmul.mubr.f32.gmra.mrb[0].mxu0 %v1059
        %v1369 = vpop.f32.mrb[0].mxu0
        %v1370 = vadd.f32 %v1140, %v1369
        %v1371 = vpop.f32.mrb[0].mxu0
        %v1372 = vadd.f32 %v1144, %v1371
        %1373 = vmatprep.mubr.f32.mxu0 %v1062
        %1374 = vmatmul.mubr.f32.gmra.mrb[0].mxu0 %v1061
        %v1375 = vpop.f32.mrb[0].mxu0
        %v1376 = vadd.f32 %v1140, %v1375
        %v1377 = vpop.f32.mrb[0].mxu0
        %v1378 = vadd.f32 %v1144, %v1377
        %1379 = vmatprep.mubr.f32.mxu0 %v1064
        %1380 = vmatmul.mubr.f32.gmra.mrb[0].mxu0 %v1063
        %v1381 = vpop.f32.mrb[0].mxu0
        %v1382 = vadd.f32 %v1140, %v1381
        %v1383 = vpop.f32.mrb[0].mxu0
        %v1384 = vadd.f32 %v1144, %v1383
        %1385 = vmatprep.mubr.f32.mxu0 %v1066
        %1386 = vmatmul.mubr.f32.gmra.mrb[0].mxu0 %v1065
        %v1387 = vpop.f32.mrb[0].mxu0
        %v1388 = vadd.f32 %v1140, %v1387
        %v1389 = vpop.f32.mrb[0].mxu0
        %v1390 = vadd.f32 %v1144, %v1389
        %1391 = vmatprep.mubr.f32.mxu0 %v1068
        %1392 = vmatmul.mubr.f32.gmra.mrb[0].mxu0 %v1067
        %v1393 = vpop.f32.mrb[0].mxu0
        %v1394 = vadd.f32 %v1140, %v1393
        %v1395 = vpop.f32.mrb[0].mxu0
        %v1396 = vadd.f32 %v1144, %v1395
        %1397 = vmatprep.mubr.f32.mxu0 %v1070
        %1398 = vmatmul.mubr.f32.gmra.mrb[0].mxu0 %v1069
        %v1399 = vpop.f32.mrb[0].mxu0
        %v1400 = vadd.f32 %v1140, %v1399
        %v1401 = vpop.f32.mrb[0].mxu0
        %v1402 = vadd.f32 %v1144, %v1401
        %1403 = vdwg.mxu0
        %1404 = vst [vmem:[%s265] sm:$0xff] %v1214
        %1405 = vst [vmem:[%s265 + $0x8] sm:$0xff] %v1216
        %1406 = vst [vmem:[%s265 + $0x10] sm:$0xff] %v1220
        %1407 = vst [vmem:[%s265 + $0x18] sm:$0xff] %v1222
        %1408 = vst [vmem:[%s265 + $0x20] sm:$0xff] %v1226
        %1409 = vst [vmem:[%s265 + $0x28] sm:$0xff] %v1228
        %1410 = vst [vmem:[%s265 + $0x30] sm:$0xff] %v1232
        %1411 = vst [vmem:[%s265 + $0x38] sm:$0xff] %v1234
        %1412 = vst [vmem:[%s265 + $0x40] sm:$0xff] %v1238
        %1413 = vst [vmem:[%s265 + $0x48] sm:$0xff] %v1240
        %1414 = vst [vmem:[%s265 + $0x50] sm:$0xff] %v1244
        %1415 = vst [vmem:[%s265 + $0x58] sm:$0xff] %v1246
        %1416 = vst [vmem:[%s265 + $0x60] sm:$0xff] %v1250
        %1417 = vst [vmem:[%s265 + $0x68] sm:$0xff] %v1252
        %1418 = vst [vmem:[%s265 + $0x70] sm:$0xff] %v1256
        %1419 = vst [vmem:[%s265 + $0x78] sm:$0xff] %v1258
        %1420 = vst [vmem:[%s265 + $0x80] sm:$0xff] %v1262
        %1421 = vst [vmem:[%s265 + $0x88] sm:$0xff] %v1264
        %1422 = vst [vmem:[%s265 + $0x90] sm:$0xff] %v1268
        %1423 = vst [vmem:[%s265 + $0x98] sm:$0xff] %v1270
        %1424 = vst [vmem:[%s265 + $0xa0] sm:$0xff] %v1274
        %1425 = vst [vmem:[%s265 + $0xa8] sm:$0xff] %v1276
        %1426 = vst [vmem:[%s265 + $0xb0] sm:$0xff] %v1280
        %1427 = vst [vmem:[%s265 + $0xb8] sm:$0xff] %v1282
        %1428 = vst [vmem:[%s265 + $0xc0] sm:$0xff] %v1286
        %1429 = vst [vmem:[%s265 + $0xc8] sm:$0xff] %v1288
        %1430 = vst [vmem:[%s265 + $0xd0] sm:$0xff] %v1292
        %1431 = vst [vmem:[%s265 + $0xd8] sm:$0xff] %v1294
        %1432 = vst [vmem:[%s265 + $0xe0] sm:$0xff] %v1298
        %1433 = vst [vmem:[%s265 + $0xe8] sm:$0xff] %v1300
        %1434 = vst [vmem:[%s265 + $0xf0] sm:$0xff] %v1304
        %1435 = vst [vmem:[%s265 + $0xf8] sm:$0xff] %v1306
        %1436 = vst [vmem:[%s265 + $0x100] sm:$0xff] %v1310
        %1437 = vst [vmem:[%s265 + $0x108] sm:$0xff] %v1312
        %1438 = vst [vmem:[%s265 + $0x110] sm:$0xff] %v1316
        %1439 = vst [vmem:[%s265 + $0x118] sm:$0xff] %v1318
        %1440 = vst [vmem:[%s265 + $0x120] sm:$0xff] %v1322
        %1441 = vst [vmem:[%s265 + $0x128] sm:$0xff] %v1324
        %1442 = vst [vmem:[%s265 + $0x130] sm:$0xff] %v1328
        %1443 = vst [vmem:[%s265 + $0x138] sm:$0xff] %v1330
        %1444 = vst [vmem:[%s265 + $0x140] sm:$0xff] %v1334
        %1445 = vst [vmem:[%s265 + $0x148] sm:$0xff] %v1336
        %1446 = vst [vmem:[%s265 + $0x150] sm:$0xff] %v1340
        %1447 = vst [vmem:[%s265 + $0x158] sm:$0xff] %v1342
        %1448 = vst [vmem:[%s265 + $0x160] sm:$0xff] %v1346
        %1449 = vst [vmem:[%s265 + $0x168] sm:$0xff] %v1348
        %1450 = vst [vmem:[%s265 + $0x170] sm:$0xff] %v1352
        %1451 = vst [vmem:[%s265 + $0x178] sm:$0xff] %v1354
        %1452 = vst [vmem:[%s265 + $0x180] sm:$0xff] %v1358
        %1453 = vst [vmem:[%s265 + $0x188] sm:$0xff] %v1360
        %1454 = vst [vmem:[%s265 + $0x190] sm:$0xff] %v1364
        %1455 = vst [vmem:[%s265 + $0x198] sm:$0xff] %v1366
        %1456 = vst [vmem:[%s265 + $0x1a0] sm:$0xff] %v1370
        %1457 = vst [vmem:[%s265 + $0x1a8] sm:$0xff] %v1372
        %1458 = vst [vmem:[%s265 + $0x1b0] sm:$0xff] %v1376
        %1459 = vst [vmem:[%s265 + $0x1b8] sm:$0xff] %v1378
        %1460 = vst [vmem:[%s265 + $0x1c0] sm:$0xff] %v1382
        %1461 = vst [vmem:[%s265 + $0x1c8] sm:$0xff] %v1384
        %1462 = vst [vmem:[%s265 + $0x1d0] sm:$0xff] %v1388
        %1463 = vst [vmem:[%s265 + $0x1d8] sm:$0xff] %v1390
        %1464 = vst [vmem:[%s265 + $0x1e0] sm:$0xff] %v1394
        %1465 = vst [vmem:[%s265 + $0x1e8] sm:$0xff] %v1396
        %1466 = vst [vmem:[%s265 + $0x1f0] sm:$0xff] %v1400
        %1467 = vst [vmem:[%s265 + $0x1f8] sm:$0xff] %v1402
        %s1468 = sand.u32 %s141, 1
        %s1469 = scalar_lea.sflag [#allocation4], %s1468
        %s1470 = sand.u32 %s141, 1
        %s1471 = smul.addr %s1470, 512
        %s1472 = scalar_lea.vmem [#allocation7], %s1471
        // Predicated region
        $region49: #{tpu_custom_call.1} parent=39 // pred_check
          %p1473 = pneg %p151
        $region50: #{tpu_custom_call.1} parent=39 // pred_check_branch
          %1475 = sbr.rel (%p1473) target = $region52
        $region51: #{tpu_custom_call.1} parent=39 // pred_region
          %s1476 = smul.u32 32, %s23
          %s1477 = ssub.s32 50, %s1476
          %p1478 = scmp.lt.s32.totalorder %s1477, 32
          %s1479 = scalar_select %p1478, %s1477, 32
          %s1480 = smul.u32 128, %s1479
          %s1481 = smul.u32 %s1480, 2
          %s1483 = ssub.s32 8192, %s1481
          %1484 = vsyncadd %s1469, %s1483
          %p1485 = scmp.ne.s32.totalorder 0, %s1481
          %s1486 = smul.addr %s1476, 2
          %s1487 = smul.addr %s1486, 128
          %s1488 = scalar_lea.hbm %s5, %s1487
          %s1489 = smul.u32 16, %s1479
          %s1490 = sshll.u32 %s1472, 4
          %s1491 = int_to_ptr.vmem [resolvable:$true] %s1490
          %s1492 = sshll.u32 %s1489, 4
          %1496 = dma.vmem_to_hbm [thread:$0]  (%p1485), %s1491, %s1492, %s1488, %s1469, 256, 256, 16
        $region52: #{tpu_custom_call.1} parent=39 // pred_fallthru
          _
      $region40: #{tpu_custom_call.1} parent=5 // pred_fallthru
        _
      %p1497 = scmp.le.s32.totalorder 2, %s18
      // Predicated region
      $region53: #{tpu_custom_call.1} parent=5 // pred_check
        %p1498 = pneg %p1497
      $region54: #{tpu_custom_call.1} parent=5 // pred_check_branch
        %1500 = sbr.rel (%p1498) target = $region56
      $region55: #{tpu_custom_call.1} parent=5 // pred_region
        %s1501 = ssub.s32 %s18, 2
        // Predicated region
        $region57: #{tpu_custom_call.1} parent=55 // pred_check
          %p1502 = pneg %p157
        $region58: #{tpu_custom_call.1} parent=55 // pred_check_branch
          %1504 = sbr.rel (%p1502) target = $region60
        $region59: #{tpu_custom_call.1} parent=55 // pred_region
          %s1505 = sand.u32 %s142, 1
          %s1506 = scalar_lea.sflag [#allocation4], %s1505
          %s1507 = sand.u32 %s142, 1
          %s1508 = smul.addr %s1507, 512
          %s1509 = scalar_lea.vmem [#allocation7], %s1508
          %1510 = dma.done %s1506, 8192
        $region60: #{tpu_custom_call.1} parent=55 // pred_fallthru
          _
      $region56: #{tpu_custom_call.1} parent=5 // pred_fallthru
        _
    $region6: #{tpu_custom_call.1} parent=1 // loop_footer
      %s22 = sadd.s32 1, %s18
    $region7: #{tpu_custom_call.1} parent=1 // loop_footer_branch
      %17 = sbr.rel target = $region3
    $region8: #{tpu_custom_call.1} parent=1 // loop_exit
      _
    %1511 = vsyncpa [#allocation3], 1
    %s1512 = scalar_lea.sflag [#allocation3], 1
    %1513 = vsyncpa %s1512, 1
    %1514 = vsyncpa [#allocation6], 1
    %1515 = vsyncpa [#allocation4], 1
    %s1516 = scalar_lea.sflag [#allocation4], 1
    %1517 = vsyncpa %s1516, 1

</llo_original>
